<compile_context>
chip_gen: v5e
topology: v5e:2x2
jax: 0.10.0
libtpu: 0.0.40
codegen_flags: <defaults>
</compile_context>

<pallas_src>
import functools
import math

import numpy as np
import jax
import jax.numpy as jnp
from jax import lax
from jax.experimental import pallas as pl
from jax.experimental.pallas import tpu as pltpu

EPS = 1e-5            # nn.LayerNorm default
NEG_INF = -1e28       # in-batch mask fill (matches torch masked_fill value)
CROSS_NEG = -2e28     # cross-batch fill (strictly below NEG_INF)


def _layernorm(x, gamma, beta):
    mu = jnp.mean(x, axis=-1, keepdims=True)
    var = jnp.mean((x - mu) ** 2, axis=-1, keepdims=True)
    return (x - mu) * lax.rsqrt(var + EPS) * gamma + beta


# --------------------------------------------------------------------------- #
# Fused kernel: embedding -> L decoder blocks -> vocab head
# --------------------------------------------------------------------------- #
def decoder_fused_kernel(
        onehot_ref, wemb_ref, pos_ref, enc_ref,
        expand_ref, gather_ref, hmask_ref,
        trg_bias_ref, src_bias_ref,
        wqkv_ref, vecs_ref, w1_ref, bf1_ref, w2_ref,
        wout_ref, bout_ref,
        o_ref, x_scr):
    f32 = jnp.float32
    l = pl.program_id(0)
    E = enc_ref.shape[1]

    # ---- embedding (only at the first layer step): one-hot @ word_emb + pos ----
    @pl.when(l == 0)
    def _():
        x_scr[...] = (jnp.dot(onehot_ref[...], wemb_ref[...],
                              preferred_element_type=f32) + pos_ref[...])

    x = x_scr[...]                     # (NS, E) decoder state (VMEM-resident)
    enc = enc_ref[...]                 # (NS, E) encoder output
    expand = expand_ref[...]           # (NHS, NS) 0/1 row expander (batch+head stack)
    gather = gather_ref[...]           # (NS, NHS) 0/1 head re-assembler
    hmask = hmask_ref[...]             # (NHS, E) one-hot head-column masks

    def wslab(k):                      # k-th (E, E) square matrix of this layer
        return wqkv_ref[0, k * E:(k + 1) * E, :]

    def vrow(i):                       # i-th (1, E) bias/gamma/beta of this layer
        return vecs_ref[0, i:i + 1, :]

    def attention(q_in, kv_in, bias, wv, wk, wq, wfc, bfc):
        # wv/wk/wq are block-diagonal (E, E); wq is pre-scaled by 1/sqrt(E).
        v = jnp.dot(kv_in, wv, preferred_element_type=f32)          # (NS, E)
        k = jnp.dot(kv_in, wk, preferred_element_type=f32)          # (NS, E)
        q = jnp.dot(q_in, wq, preferred_element_type=f32)           # (NS, E)
        # Stack batches+heads into rows; mask Q to head-h columns so the energy
        # dot picks up exactly the per-head inner product.
        q_stack = jnp.dot(expand, q, preferred_element_type=f32) * hmask  # (NHS, E)
        energy = lax.dot_general(q_stack, k, (((1,), (1,)), ((), ())),
                                 preferred_element_type=f32) + bias       # (NHS, NS)
        energy = energy - jnp.max(energy, axis=-1, keepdims=True)
        p = jnp.exp(energy)
        s = jnp.sum(p, axis=-1, keepdims=True)
        r = pl.reciprocal(s, approx=True)          # EUP vrcp (own VLIW slot)
        r = r * (2.0 - s * r)                      # one Newton step -> f32 accuracy
        ctx_stack = jnp.dot(p * r, v, preferred_element_type=f32) * hmask  # (NHS, E)
        ctx = jnp.dot(gather, ctx_stack, preferred_element_type=f32)       # (NS, E)
        return jnp.dot(ctx, wfc, preferred_element_type=f32) + bfc

    # DecoderBlock: masked self-attention + add&norm (dropout = identity).
    sa = attention(x, x, trg_bias_ref[...],
                   wslab(0), wslab(1), wslab(2), wslab(3), vrow(0))
    queries = _layernorm(sa + x, vrow(1), vrow(2))

    # TransformerBlock: cross-attention over encoder output + add&norm.
    ca = attention(queries, enc, src_bias_ref[...],
                   wslab(4), wslab(5), wslab(6), wslab(7), vrow(3))
    x1 = _layernorm(ca + queries, vrow(4), vrow(5))

    # Feed-forward: Linear -> ReLU -> Linear, then add&norm.
    h1 = jnp.maximum(
        jnp.dot(x1, w1_ref[0], preferred_element_type=f32) + bf1_ref[0], 0.0)
    ff = jnp.dot(h1, w2_ref[0], preferred_element_type=f32) + vrow(6)
    xo = _layernorm(ff + x1, vrow(7), vrow(8))
    x_scr[...] = xo                                # carry to next layer step

    # ---- vocab head (only at the last layer step): lane-dense (NS, V) ----
    @pl.when(l == pl.num_programs(0) - 1)
    def _():
        o_ref[...] = (jnp.dot(xo, wout_ref[...], preferred_element_type=f32)
                      + bout_ref[...]).astype(o_ref.dtype)


# --------------------------------------------------------------------------- #
# One-time parameter prep (hoisted out of the per-call path)
# --------------------------------------------------------------------------- #
def _block_diag(w_t, heads):
    """Block-diag matrix so x(S,E) @ bd == per-head x_h @ w_t for every head."""
    dh = w_t.shape[0]
    e = heads * dh
    bd = jnp.zeros((e, e), dtype=w_t.dtype)
    for h in range(heads):
        bd = bd.at[h * dh:(h + 1) * dh, h * dh:(h + 1) * dh].set(w_t)
    return bd


def prepare_decoder(params, *, heads, batch, seq):
    """Precompute packed weights / selector matrices shared by every forward."""
    V, E = params["word_emb"].shape
    dh = E // heads
    F = params["layers"][0]["W1"].shape[0]
    N, S = batch, seq
    NS, NHS = N * S, N * heads * S
    scale = 1.0 / math.sqrt(E)

    wqkv, vecs, w1s, bf1s, w2s = [], [], [], [], []
    for lp in params["layers"]:
        wqkv.append(jnp.concatenate([
            _block_diag(lp["sWv"].T, heads),
            _block_diag(lp["sWk"].T, heads),
            _block_diag(lp["sWq"].T, heads) * scale,    # fold 1/sqrt(E) into Q
            lp["sWfc"].T,
            _block_diag(lp["cWv"].T, heads),
            _block_diag(lp["cWk"].T, heads),
            _block_diag(lp["cWq"].T, heads) * scale,
            lp["cWfc"].T,
        ], axis=0))                                                  # (8E, E)
        vecs.append(jnp.stack([
            lp["sbfc"], lp["ng"], lp["nb"], lp["cbfc"], lp["g1"], lp["b1"],
            lp["bf2"], lp["g2"], lp["b2"]], axis=0))                 # (9, E)
        w1s.append(lp["W1"].T)                                       # (E, F)
        bf1s.append(lp["bf1"].reshape(1, F))                         # (1, F)
        w2s.append(lp["W2"].T)                                       # (F, E)

    # Batch+head stacking selectors and head-column masks (host-side, once).
    expand = np.zeros((NHS, NS), np.float32)
    hmask = np.zeros((NHS, E), np.float32)
    for b in range(N):
        for h in range(heads):
            for i in range(S):
                r = (b * heads + h) * S + i
                expand[r, b * S + i] = 1.0
                hmask[r, h * dh:(h + 1) * dh] = 1.0

    return dict(
        word_emb=params["word_emb"],
        pos_tiled=jnp.tile(params["pos_emb"][:S], (N, 1)),          # (NS, E)
        wqkv=jnp.stack(wqkv), vecs=jnp.stack(vecs),
        w1=jnp.stack(w1s), bf1=jnp.stack(bf1s), w2=jnp.stack(w2s),
        wout=params["Wout"].T, bout=params["bout"].reshape(1, V),
        expand=jnp.asarray(expand), gather=jnp.asarray(expand.T),
        hmask=jnp.asarray(hmask),
    )


# --------------------------------------------------------------------------- #
# Forward wrapper (jitted): one fused pallas_call
# --------------------------------------------------------------------------- #
def decoder_forward(tokens, enc_out, src_mask, trg_mask, prep):
    N, S = tokens.shape
    V, E = prep["word_emb"].shape
    L = prep["wqkv"].shape[0]
    F = prep["w1"].shape[2]
    NS = N * S
    NHS = prep["expand"].shape[0]
    H = NHS // NS

    onehot = jax.nn.one_hot(tokens.reshape(NS), V, dtype=jnp.float32)
    enc_flat = enc_out.reshape(NS, E).astype(jnp.float32)

    def expand_bias(mask):
        # (N,S,S) {0,1} -> (NHS, NS) additive bias with cross-batch blocks at -2e28.
        if mask is None:
            base = jnp.zeros((N, S, S), jnp.float32)
        else:
            base = jnp.where(mask == 0, NEG_INF, 0.0).astype(jnp.float32)
        same = jnp.eye(N, dtype=bool)                          # (N, N): b == b'
        full = jnp.where(same[:, None, None, :, None],
                         jnp.broadcast_to(base[:, None, :, None, :],
                                          (N, H, S, N, S)),
                         CROSS_NEG)
        return full.reshape(NHS, NS)

    trg_bias = expand_bias(trg_mask)
    src_bias = expand_bias(src_mask)

    args = [onehot, prep["word_emb"], prep["pos_tiled"], enc_flat,
            prep["expand"], prep["gather"], prep["hmask"],
            trg_bias, src_bias,
            prep["wqkv"], prep["vecs"], prep["w1"], prep["bf1"], prep["w2"],
            prep["wout"], prep["bout"]]

    def const_spec(a):
        nd = a.ndim
        return pl.BlockSpec(a.shape, lambda l, nd=nd: (0,) * nd)

    def layer_spec(a):
        nd = a.ndim
        return pl.BlockSpec((1,) + a.shape[1:],
                            lambda l, nd=nd: (l,) + (0,) * (nd - 1))

    in_specs = ([const_spec(a) for a in args[:9]]
                + [layer_spec(a) for a in args[9:14]]
                + [const_spec(a) for a in args[14:]])

    def _mm(m, k, n):
        return 2 * m * k * n
    attn_flops = (3 * _mm(NS, E, E) + _mm(NHS, NS, E) + _mm(NHS, E, NS)
                  + _mm(NHS, NS, E) + _mm(NS, NHS, E) + _mm(NS, E, E))
    flops = (_mm(NS, V, E)
             + L * (2 * attn_flops + _mm(NS, E, F) + _mm(NS, F, E))
             + _mm(NS, E, V))
    bytes_acc = int(sum(int(a.size) * a.dtype.itemsize for a in args)
                    + NS * V * 4)
    cost = pl.CostEstimate(flops=int(flops),
                           transcendentals=int(2 * L * NHS * NS),
                           bytes_accessed=bytes_acc)

    logits = pl.pallas_call(
        decoder_fused_kernel,
        out_shape=jax.ShapeDtypeStruct((NS, V), jnp.float32),
        grid=(L,),
        in_specs=in_specs,
        out_specs=pl.BlockSpec((NS, V), lambda l: (0, 0)),
        scratch_shapes=[pltpu.VMEM((NS, E), jnp.float32)],
        compiler_params=pltpu.CompilerParams(
            dimension_semantics=("arbitrary",)),   # activation carries over layers
        cost_estimate=cost,
    )(*args)
    return logits.reshape(N, S, V)


# --------------------------------------------------------------------------- #
# Pure-JAX reference mirroring the PyTorch forward (eval mode)
# --------------------------------------------------------------------------- #
def _ref_attention(values, keys, queries, mask, Wv, Wk, Wq, Wfc, bfc, heads, E):
    N = queries.shape[0]
    dh = E // heads
    v = values.reshape(N, -1, heads, dh) @ Wv.T
    k = keys.reshape(N, -1, heads, dh) @ Wk.T
    q = queries.reshape(N, -1, heads, dh) @ Wq.T
    energy = jnp.einsum("nqhd,nkhd->nhqk", q, k)
    if mask is not None:
        energy = jnp.where(mask[:, None, :, :] == 0, -1e28, energy)
    attn = jax.nn.softmax(energy / math.sqrt(E), axis=3)
    out = jnp.einsum("nhqk,nkhd->nqhd", attn, v).reshape(N, -1, E)
    return out @ Wfc.T + bfc


def reference_decoder(tokens, enc_out, src_mask, trg_mask, params, heads):
    N, S = tokens.shape
    V, E = params["word_emb"].shape
    x = params["word_emb"][tokens] + params["pos_emb"][:S][None, :, :]
    for lp in params["layers"]:
        a = _ref_attention(x, x, x, trg_mask, lp["sWv"], lp["sWk"], lp["sWq"],
                           lp["sWfc"], lp["sbfc"], heads, E)
        q = _layernorm(a + x, lp["ng"], lp["nb"])
        a2 = _ref_attention(enc_out, enc_out, q, src_mask, lp["cWv"], lp["cWk"],
                            lp["cWq"], lp["cWfc"], lp["cbfc"], heads, E)
        x1 = _layernorm(a2 + q, lp["g1"], lp["b1"])
        h1 = jax.nn.relu(x1 @ lp["W1"].T + lp["bf1"])
        ff = h1 @ lp["W2"].T + lp["bf2"]
        x = _layernorm(ff + x1, lp["g2"], lp["b2"])
    return x @ params["Wout"].T + params["bout"]


# --------------------------------------------------------------------------- #
# Driver
# --------------------------------------------------------------------------- #
if __name__ == "__main__":
    # embed_size=32, heads=4, forward_expansion=4, num_layers=2, vocab=128,
    # max_length=16, batch=2, seq=8, dropout eval-mode identity.
    N, S, E, H, FE, L = 2, 8, 32, 4, 4, 2
    VOCAB, MAXLEN = 128, 16
    dh = E // H
    F = FE * E

    key = jax.random.PRNGKey(0)
    k_iter = iter(jax.random.split(key, 64))

    def nrm(shape, s=0.1):
        return s * jax.random.normal(next(k_iter), shape, jnp.float32)

    params = {
        "word_emb": nrm((VOCAB, E), 0.5),
        "pos_emb": nrm((MAXLEN, E), 0.5),
        "Wout": nrm((VOCAB, E)),
        "bout": nrm((VOCAB,)),
        "layers": [],
    }
    for _ in range(L):
        params["layers"].append({
            "sWv": nrm((dh, dh), 0.3), "sWk": nrm((dh, dh), 0.3),
            "sWq": nrm((dh, dh), 0.3),
            "sWfc": nrm((E, E)), "sbfc": nrm((E,)),
            "ng": jnp.ones((E,), jnp.float32), "nb": jnp.zeros((E,), jnp.float32),
            "cWv": nrm((dh, dh), 0.3), "cWk": nrm((dh, dh), 0.3),
            "cWq": nrm((dh, dh), 0.3),
            "cWfc": nrm((E, E)), "cbfc": nrm((E,)),
            "g1": jnp.ones((E,), jnp.float32), "b1": jnp.zeros((E,), jnp.float32),
            "W1": nrm((F, E)), "bf1": nrm((F,)),
            "W2": nrm((E, F)), "bf2": nrm((E,)),
            "g2": jnp.ones((E,), jnp.float32), "b2": jnp.zeros((E,), jnp.float32),
        })

    tokens = jax.random.randint(next(k_iter), (N, S), 0, VOCAB, jnp.int32)
    enc_out = jax.random.normal(next(k_iter), (N, S, E), jnp.float32)
    trg_mask = jnp.broadcast_to(jnp.tril(jnp.ones((S, S), jnp.int32)), (N, S, S))
    src_mask = jnp.ones((N, S, S), jnp.int32)   # no source padding

    # One-time hoisted parameter prep (block-diag packs, selectors, head masks).
    prep = prepare_decoder(params, heads=H, batch=N, seq=S)

    fwd = jax.jit(decoder_forward)
    out = jax.block_until_ready(fwd(tokens, enc_out, src_mask, trg_mask, prep))

    ref = reference_decoder(tokens, enc_out, src_mask, trg_mask, params, H)
    assert out.shape == (N, S, VOCAB)
    err = float(jnp.max(jnp.abs(out - ref)))
    assert err < 1e-3, f"max abs err {err}"
    print("KERNEL_OK")
</pallas_src>

<mosaic_0001>
module attributes {stable_mosaic.version = 11 : i64} {
  func.func @decoder_fused_kernel(%arg0: i32, %arg1: memref<16x128xf32, #tpu.memory_space<vmem>>, %arg2: memref<128x32xf32, #tpu.memory_space<vmem>>, %arg3: memref<16x32xf32, #tpu.memory_space<vmem>>, %arg4: memref<16x32xf32, #tpu.memory_space<vmem>>, %arg5: memref<64x16xf32, #tpu.memory_space<vmem>>, %arg6: memref<16x64xf32, #tpu.memory_space<vmem>>, %arg7: memref<64x32xf32, #tpu.memory_space<vmem>>, %arg8: memref<64x16xf32, #tpu.memory_space<vmem>>, %arg9: memref<64x16xf32, #tpu.memory_space<vmem>>, %arg10: memref<1x256x32xf32, #tpu.memory_space<vmem>>, %arg11: memref<1x9x32xf32, #tpu.memory_space<vmem>>, %arg12: memref<1x32x128xf32, #tpu.memory_space<vmem>>, %arg13: memref<1x1x128xf32, #tpu.memory_space<vmem>>, %arg14: memref<1x128x32xf32, #tpu.memory_space<vmem>>, %arg15: memref<32x128xf32, #tpu.memory_space<vmem>>, %arg16: memref<1x128xf32, #tpu.memory_space<vmem>>, %arg17: memref<16x128xf32, #tpu.memory_space<vmem>>, %arg18: memref<16x32xf32, #tpu.memory_space<vmem>>) attributes {dimension_semantics = [#tpu.dimension_semantics<arbitrary>], iteration_bounds = array<i64: 2>, scalar_prefetch = 0 : i64, scratch_operands = 1 : i64, tpu.core_type = #tpu.core_type<tc>, window_params = [{pipeline_mode = #tpu.pipeline_mode<synchronous>, transform_indices = @transform_0, window_bounds = array<i64: 16, 128>}, {pipeline_mode = #tpu.pipeline_mode<synchronous>, transform_indices = @transform_1, window_bounds = array<i64: 128, 32>}, {pipeline_mode = #tpu.pipeline_mode<synchronous>, transform_indices = @transform_2, window_bounds = array<i64: 16, 32>}, {pipeline_mode = #tpu.pipeline_mode<synchronous>, transform_indices = @transform_3, window_bounds = array<i64: 16, 32>}, {pipeline_mode = #tpu.pipeline_mode<synchronous>, transform_indices = @transform_4, window_bounds = array<i64: 64, 16>}, {pipeline_mode = #tpu.pipeline_mode<synchronous>, transform_indices = @transform_5, window_bounds = array<i64: 16, 64>}, {pipeline_mode = #tpu.pipeline_mode<synchronous>, transform_indices = @transform_6, window_bounds = array<i64: 64, 32>}, {pipeline_mode = #tpu.pipeline_mode<synchronous>, transform_indices = @transform_7, window_bounds = array<i64: 64, 16>}, {pipeline_mode = #tpu.pipeline_mode<synchronous>, transform_indices = @transform_8, window_bounds = array<i64: 64, 16>}, {transform_indices = @transform_9, window_bounds = array<i64: 1, 256, 32>}, {transform_indices = @transform_10, window_bounds = array<i64: 1, 9, 32>}, {transform_indices = @transform_11, window_bounds = array<i64: 1, 32, 128>}, {transform_indices = @transform_12, window_bounds = array<i64: 1, 1, 128>}, {transform_indices = @transform_13, window_bounds = array<i64: 1, 128, 32>}, {pipeline_mode = #tpu.pipeline_mode<synchronous>, transform_indices = @transform_14, window_bounds = array<i64: 32, 128>}, {pipeline_mode = #tpu.pipeline_mode<synchronous>, transform_indices = @transform_15, window_bounds = array<i64: 1, 128>}, {pipeline_mode = #tpu.pipeline_mode<synchronous>, transform_indices = @transform_16, window_bounds = array<i64: 16, 128>}]} {
    %c0_i32 = arith.constant 0 : i32
    %0 = arith.cmpi eq, %arg0, %c0_i32 : i32
    %1 = arith.extui %0 : i1 to i32
    %c0_i32_0 = arith.constant 0 : i32
    %2 = arith.cmpi ne, %1, %c0_i32_0 : i32
    scf.if %2 {
      %c0_101 = arith.constant 0 : index
      %c0_102 = arith.constant 0 : index
      %185 = vector.load %arg1[%c0_101, %c0_102] : memref<16x128xf32, #tpu.memory_space<vmem>>, vector<16x128xf32>
      %c0_103 = arith.constant 0 : index
      %c0_104 = arith.constant 0 : index
      %186 = vector.load %arg2[%c0_103, %c0_104] : memref<128x32xf32, #tpu.memory_space<vmem>>, vector<128x32xf32>
      %cst_105 = arith.constant dense<0.000000e+00> : vector<16x32xf32>
      %187 = tpu.matmul %185, %186, %cst_105 {dimension_numbers = #tpu.dot_dimension_numbers<[1], [0], [0], [1], [0, 0, 1, 1], [], []>} : vector<16x128xf32>, vector<128x32xf32>, vector<16x32xf32> -> vector<16x32xf32>
      %c0_106 = arith.constant 0 : index
      %c0_107 = arith.constant 0 : index
      %188 = vector.load %arg3[%c0_106, %c0_107] : memref<16x32xf32, #tpu.memory_space<vmem>>, vector<16x32xf32>
      %189 = arith.addf %187, %188 : vector<16x32xf32>
      %c0_108 = arith.constant 0 : index
      %c0_109 = arith.constant 0 : index
      %190 = vector.load %arg18[%c0_108, %c0_109] : memref<16x32xf32, #tpu.memory_space<vmem>>, vector<16x32xf32>
      tpu.vector_store %arg18[%c0_108, %c0_109], %189 {strides = array<i32>} : memref<16x32xf32, #tpu.memory_space<vmem>>, vector<16x32xf32>,
    } else {
    }
    %c0 = arith.constant 0 : index
    %c0_1 = arith.constant 0 : index
    %3 = vector.load %arg18[%c0, %c0_1] : memref<16x32xf32, #tpu.memory_space<vmem>>, vector<16x32xf32>
    %c0_2 = arith.constant 0 : index
    %c0_3 = arith.constant 0 : index
    %4 = vector.load %arg4[%c0_2, %c0_3] : memref<16x32xf32, #tpu.memory_space<vmem>>, vector<16x32xf32>
    %c0_4 = arith.constant 0 : index
    %c0_5 = arith.constant 0 : index
    %5 = vector.load %arg5[%c0_4, %c0_5] : memref<64x16xf32, #tpu.memory_space<vmem>>, vector<64x16xf32>
    %c0_6 = arith.constant 0 : index
    %c0_7 = arith.constant 0 : index
    %6 = vector.load %arg6[%c0_6, %c0_7] : memref<16x64xf32, #tpu.memory_space<vmem>>, vector<16x64xf32>
    %c0_8 = arith.constant 0 : index
    %c0_9 = arith.constant 0 : index
    %7 = vector.load %arg7[%c0_8, %c0_9] : memref<64x32xf32, #tpu.memory_space<vmem>>, vector<64x32xf32>
    %c0_10 = arith.constant 0 : index
    %c0_11 = arith.constant 0 : index
    %8 = vector.load %arg8[%c0_10, %c0_11] : memref<64x16xf32, #tpu.memory_space<vmem>>, vector<64x16xf32>
    %c0_12 = arith.constant 0 : index
    %c0_13 = arith.constant 0 : index
    %c0_14 = arith.constant 0 : index
    %9 = vector.load %arg10[%c0_12, %c0_13, %c0_14] : memref<1x256x32xf32, #tpu.memory_space<vmem>>, vector<1x32x32xf32>
    %10 = vector.shape_cast %9 : vector<1x32x32xf32> to vector<32x32xf32>
    %c0_15 = arith.constant 0 : index
    %c32 = arith.constant 32 : index
    %c0_16 = arith.constant 0 : index
    %11 = vector.load %arg10[%c0_15, %c32, %c0_16] : memref<1x256x32xf32, #tpu.memory_space<vmem>>, vector<1x32x32xf32>
    %12 = vector.shape_cast %11 : vector<1x32x32xf32> to vector<32x32xf32>
    %c0_17 = arith.constant 0 : index
    %c64 = arith.constant 64 : index
    %c0_18 = arith.constant 0 : index
    %13 = vector.load %arg10[%c0_17, %c64, %c0_18] : memref<1x256x32xf32, #tpu.memory_space<vmem>>, vector<1x32x32xf32>
    %14 = vector.shape_cast %13 : vector<1x32x32xf32> to vector<32x32xf32>
    %c0_19 = arith.constant 0 : index
    %c96 = arith.constant 96 : index
    %c0_20 = arith.constant 0 : index
    %15 = vector.load %arg10[%c0_19, %c96, %c0_20] : memref<1x256x32xf32, #tpu.memory_space<vmem>>, vector<1x32x32xf32>
    %16 = vector.shape_cast %15 : vector<1x32x32xf32> to vector<32x32xf32>
    %c0_21 = arith.constant 0 : index
    %c0_22 = arith.constant 0 : index
    %c0_23 = arith.constant 0 : index
    %17 = vector.load %arg11[%c0_21, %c0_22, %c0_23] : memref<1x9x32xf32, #tpu.memory_space<vmem>>, vector<1x1x32xf32>
    %18 = vector.shape_cast %17 : vector<1x1x32xf32> to vector<1x32xf32>
    %cst = arith.constant dense<0.000000e+00> : vector<16x32xf32>
    %19 = tpu.matmul %3, %10, %cst {dimension_numbers = #tpu.dot_dimension_numbers<[1], [0], [0], [1], [0, 0, 1, 1], [], []>} : vector<16x32xf32>, vector<32x32xf32>, vector<16x32xf32> -> vector<16x32xf32>
    %cst_24 = arith.constant dense<0.000000e+00> : vector<16x32xf32>
    %20 = tpu.matmul %3, %12, %cst_24 {dimension_numbers = #tpu.dot_dimension_numbers<[1], [0], [0], [1], [0, 0, 1, 1], [], []>} : vector<16x32xf32>, vector<32x32xf32>, vector<16x32xf32> -> vector<16x32xf32>
    %cst_25 = arith.constant dense<0.000000e+00> : vector<16x32xf32>
    %21 = tpu.matmul %3, %14, %cst_25 {dimension_numbers = #tpu.dot_dimension_numbers<[1], [0], [0], [1], [0, 0, 1, 1], [], []>} : vector<16x32xf32>, vector<32x32xf32>, vector<16x32xf32> -> vector<16x32xf32>
    %cst_26 = arith.constant dense<0.000000e+00> : vector<64x32xf32>
    %22 = tpu.matmul %5, %21, %cst_26 {dimension_numbers = #tpu.dot_dimension_numbers<[1], [0], [0], [1], [0, 0, 1, 1], [], []>} : vector<64x16xf32>, vector<16x32xf32>, vector<64x32xf32> -> vector<64x32xf32>
    %23 = arith.mulf %22, %7 : vector<64x32xf32>
    %cst_27 = arith.constant dense<0.000000e+00> : vector<64x16xf32>
    %24 = tpu.matmul %23, %20, %cst_27 {dimension_numbers = #tpu.dot_dimension_numbers<[1], [1], [0], [0], [0, 0, 1, 0], [], []>} : vector<64x32xf32>, vector<16x32xf32>, vector<64x16xf32> -> vector<64x16xf32>
    %25 = arith.addf %24, %8 : vector<64x16xf32>
    %cst_28 = arith.constant dense<0xFF800000> : vector<64xf32>
    %26 = vector.multi_reduction <maximumf>, %25, %cst_28 [1] : vector<64x16xf32> to vector<64xf32>
    %27 = vector.shape_cast %26 : vector<64xf32> to vector<64x1xf32>
    %28 = vector.broadcast %27 : vector<64x1xf32> to vector<64x16xf32>
    %29 = arith.subf %25, %28 : vector<64x16xf32>
    %30 = math.exp %29 : vector<64x16xf32>
    %cst_29 = arith.constant dense<0.000000e+00> : vector<64xf32>
    %31 = vector.multi_reduction <add>, %30, %cst_29 [1] : vector<64x16xf32> to vector<64xf32>
    %32 = vector.shape_cast %31 : vector<64xf32> to vector<64x1xf32>
    %33 = tpu.reciprocal %32 {approx = true} : vector<64x1xf32> -> vector<64x1xf32>
    %34 = arith.mulf %32, %33 : vector<64x1xf32>
    %cst_30 = arith.constant 2.000000e+00 : f32
    %35 = vector.broadcast %cst_30 : f32 to vector<64x1xf32>
    %36 = arith.subf %35, %34 : vector<64x1xf32>
    %37 = arith.mulf %33, %36 : vector<64x1xf32>
    %38 = vector.broadcast %37 : vector<64x1xf32> to vector<64x16xf32>
    %39 = arith.mulf %30, %38 : vector<64x16xf32>
    %cst_31 = arith.constant dense<0.000000e+00> : vector<64x32xf32>
    %40 = tpu.matmul %39, %19, %cst_31 {dimension_numbers = #tpu.dot_dimension_numbers<[1], [0], [0], [1], [0, 0, 1, 1], [], []>} : vector<64x16xf32>, vector<16x32xf32>, vector<64x32xf32> -> vector<64x32xf32>
    %41 = arith.mulf %40, %7 : vector<64x32xf32>
    %cst_32 = arith.constant dense<0.000000e+00> : vector<16x32xf32>
    %42 = tpu.matmul %6, %41, %cst_32 {dimension_numbers = #tpu.dot_dimension_numbers<[1], [0], [0], [1], [0, 0, 1, 1], [], []>} : vector<16x64xf32>, vector<64x32xf32>, vector<16x32xf32> -> vector<16x32xf32>
    %cst_33 = arith.constant dense<0.000000e+00> : vector<16x32xf32>
    %43 = tpu.matmul %42, %16, %cst_33 {dimension_numbers = #tpu.dot_dimension_numbers<[1], [0], [0], [1], [0, 0, 1, 1], [], []>} : vector<16x32xf32>, vector<32x32xf32>, vector<16x32xf32> -> vector<16x32xf32>
    %44 = vector.broadcast %18 : vector<1x32xf32> to vector<16x32xf32>
    %45 = arith.addf %43, %44 : vector<16x32xf32>
    %46 = arith.addf %45, %3 : vector<16x32xf32>
    %c0_34 = arith.constant 0 : index
    %c1 = arith.constant 1 : index
    %c0_35 = arith.constant 0 : index
    %47 = vector.load %arg11[%c0_34, %c1, %c0_35] : memref<1x9x32xf32, #tpu.memory_space<vmem>>, vector<1x1x32xf32>
    %48 = vector.shape_cast %47 : vector<1x1x32xf32> to vector<1x32xf32>
    %c0_36 = arith.constant 0 : index
    %c2 = arith.constant 2 : index
    %c0_37 = arith.constant 0 : index
    %49 = vector.load %arg11[%c0_36, %c2, %c0_37] : memref<1x9x32xf32, #tpu.memory_space<vmem>>, vector<1x1x32xf32>
    %50 = vector.shape_cast %49 : vector<1x1x32xf32> to vector<1x32xf32>
    %cst_38 = arith.constant dense<0.000000e+00> : vector<16xf32>
    %51 = vector.multi_reduction <add>, %46, %cst_38 [1] : vector<16x32xf32> to vector<16xf32>
    %52 = vector.shape_cast %51 : vector<16xf32> to vector<16x1xf32>
    %cst_39 = arith.constant 3.200000e+01 : f32
    %53 = vector.broadcast %cst_39 : f32 to vector<16x1xf32>
    %54 = arith.divf %52, %53 : vector<16x1xf32>
    %55 = vector.broadcast %54 : vector<16x1xf32> to vector<16x32xf32>
    %56 = arith.subf %46, %55 : vector<16x32xf32>
    %57 = arith.mulf %56, %56 : vector<16x32xf32>
    %cst_40 = arith.constant dense<0.000000e+00> : vector<16xf32>
    %58 = vector.multi_reduction <add>, %57, %cst_40 [1] : vector<16x32xf32> to vector<16xf32>
    %59 = vector.shape_cast %58 : vector<16xf32> to vector<16x1xf32>
    %cst_41 = arith.constant 3.200000e+01 : f32
    %60 = vector.broadcast %cst_41 : f32 to vector<16x1xf32>
    %61 = arith.divf %59, %60 : vector<16x1xf32>
    %62 = vector.broadcast %54 : vector<16x1xf32> to vector<16x32xf32>
    %63 = arith.subf %46, %62 : vector<16x32xf32>
    %cst_42 = arith.constant 9.99999974E-6 : f32
    %64 = vector.broadcast %cst_42 : f32 to vector<16x1xf32>
    %65 = arith.addf %61, %64 : vector<16x1xf32>
    %66 = math.rsqrt %65 : vector<16x1xf32>
    %67 = vector.broadcast %66 : vector<16x1xf32> to vector<16x32xf32>
    %68 = arith.mulf %63, %67 : vector<16x32xf32>
    %69 = vector.broadcast %48 : vector<1x32xf32> to vector<16x32xf32>
    %70 = arith.mulf %68, %69 : vector<16x32xf32>
    %71 = vector.broadcast %50 : vector<1x32xf32> to vector<16x32xf32>
    %72 = arith.addf %70, %71 : vector<16x32xf32>
    %c0_43 = arith.constant 0 : index
    %c0_44 = arith.constant 0 : index
    %73 = vector.load %arg9[%c0_43, %c0_44] : memref<64x16xf32, #tpu.memory_space<vmem>>, vector<64x16xf32>
    %c0_45 = arith.constant 0 : index
    %c128 = arith.constant 128 : index
    %c0_46 = arith.constant 0 : index
    %74 = vector.load %arg10[%c0_45, %c128, %c0_46] : memref<1x256x32xf32, #tpu.memory_space<vmem>>, vector<1x32x32xf32>
    %75 = vector.shape_cast %74 : vector<1x32x32xf32> to vector<32x32xf32>
    %c0_47 = arith.constant 0 : index
    %c160 = arith.constant 160 : index
    %c0_48 = arith.constant 0 : index
    %76 = vector.load %arg10[%c0_47, %c160, %c0_48] : memref<1x256x32xf32, #tpu.memory_space<vmem>>, vector<1x32x32xf32>
    %77 = vector.shape_cast %76 : vector<1x32x32xf32> to vector<32x32xf32>
    %c0_49 = arith.constant 0 : index
    %c192 = arith.constant 192 : index
    %c0_50 = arith.constant 0 : index
    %78 = vector.load %arg10[%c0_49, %c192, %c0_50] : memref<1x256x32xf32, #tpu.memory_space<vmem>>, vector<1x32x32xf32>
    %79 = vector.shape_cast %78 : vector<1x32x32xf32> to vector<32x32xf32>
    %c0_51 = arith.constant 0 : index
    %c224 = arith.constant 224 : index
    %c0_52 = arith.constant 0 : index
    %80 = vector.load %arg10[%c0_51, %c224, %c0_52] : memref<1x256x32xf32, #tpu.memory_space<vmem>>, vector<1x32x32xf32>
    %81 = vector.shape_cast %80 : vector<1x32x32xf32> to vector<32x32xf32>
    %c0_53 = arith.constant 0 : index
    %c3 = arith.constant 3 : index
    %c0_54 = arith.constant 0 : index
    %82 = vector.load %arg11[%c0_53, %c3, %c0_54] : memref<1x9x32xf32, #tpu.memory_space<vmem>>, vector<1x1x32xf32>
    %83 = vector.shape_cast %82 : vector<1x1x32xf32> to vector<1x32xf32>
    %cst_55 = arith.constant dense<0.000000e+00> : vector<16x32xf32>
    %84 = tpu.matmul %4, %75, %cst_55 {dimension_numbers = #tpu.dot_dimension_numbers<[1], [0], [0], [1], [0, 0, 1, 1], [], []>} : vector<16x32xf32>, vector<32x32xf32>, vector<16x32xf32> -> vector<16x32xf32>
    %cst_56 = arith.constant dense<0.000000e+00> : vector<16x32xf32>
    %85 = tpu.matmul %4, %77, %cst_56 {dimension_numbers = #tpu.dot_dimension_numbers<[1], [0], [0], [1], [0, 0, 1, 1], [], []>} : vector<16x32xf32>, vector<32x32xf32>, vector<16x32xf32> -> vector<16x32xf32>
    %cst_57 = arith.constant dense<0.000000e+00> : vector<16x32xf32>
    %86 = tpu.matmul %72, %79, %cst_57 {dimension_numbers = #tpu.dot_dimension_numbers<[1], [0], [0], [1], [0, 0, 1, 1], [], []>} : vector<16x32xf32>, vector<32x32xf32>, vector<16x32xf32> -> vector<16x32xf32>
    %cst_58 = arith.constant dense<0.000000e+00> : vector<64x32xf32>
    %87 = tpu.matmul %5, %86, %cst_58 {dimension_numbers = #tpu.dot_dimension_numbers<[1], [0], [0], [1], [0, 0, 1, 1], [], []>} : vector<64x16xf32>, vector<16x32xf32>, vector<64x32xf32> -> vector<64x32xf32>
    %88 = arith.mulf %87, %7 : vector<64x32xf32>
    %cst_59 = arith.constant dense<0.000000e+00> : vector<64x16xf32>
    %89 = tpu.matmul %88, %85, %cst_59 {dimension_numbers = #tpu.dot_dimension_numbers<[1], [1], [0], [0], [0, 0, 1, 0], [], []>} : vector<64x32xf32>, vector<16x32xf32>, vector<64x16xf32> -> vector<64x16xf32>
    %90 = arith.addf %89, %73 : vector<64x16xf32>
    %cst_60 = arith.constant dense<0xFF800000> : vector<64xf32>
    %91 = vector.multi_reduction <maximumf>, %90, %cst_60 [1] : vector<64x16xf32> to vector<64xf32>
    %92 = vector.shape_cast %91 : vector<64xf32> to vector<64x1xf32>
    %93 = vector.broadcast %92 : vector<64x1xf32> to vector<64x16xf32>
    %94 = arith.subf %90, %93 : vector<64x16xf32>
    %95 = math.exp %94 : vector<64x16xf32>
    %cst_61 = arith.constant dense<0.000000e+00> : vector<64xf32>
    %96 = vector.multi_reduction <add>, %95, %cst_61 [1] : vector<64x16xf32> to vector<64xf32>
    %97 = vector.shape_cast %96 : vector<64xf32> to vector<64x1xf32>
    %98 = tpu.reciprocal %97 {approx = true} : vector<64x1xf32> -> vector<64x1xf32>
    %99 = arith.mulf %97, %98 : vector<64x1xf32>
    %cst_62 = arith.constant 2.000000e+00 : f32
    %100 = vector.broadcast %cst_62 : f32 to vector<64x1xf32>
    %101 = arith.subf %100, %99 : vector<64x1xf32>
    %102 = arith.mulf %98, %101 : vector<64x1xf32>
    %103 = vector.broadcast %102 : vector<64x1xf32> to vector<64x16xf32>
    %104 = arith.mulf %95, %103 : vector<64x16xf32>
    %cst_63 = arith.constant dense<0.000000e+00> : vector<64x32xf32>
    %105 = tpu.matmul %104, %84, %cst_63 {dimension_numbers = #tpu.dot_dimension_numbers<[1], [0], [0], [1], [0, 0, 1, 1], [], []>} : vector<64x16xf32>, vector<16x32xf32>, vector<64x32xf32> -> vector<64x32xf32>
    %106 = arith.mulf %105, %7 : vector<64x32xf32>
    %cst_64 = arith.constant dense<0.000000e+00> : vector<16x32xf32>
    %107 = tpu.matmul %6, %106, %cst_64 {dimension_numbers = #tpu.dot_dimension_numbers<[1], [0], [0], [1], [0, 0, 1, 1], [], []>} : vector<16x64xf32>, vector<64x32xf32>, vector<16x32xf32> -> vector<16x32xf32>
    %cst_65 = arith.constant dense<0.000000e+00> : vector<16x32xf32>
    %108 = tpu.matmul %107, %81, %cst_65 {dimension_numbers = #tpu.dot_dimension_numbers<[1], [0], [0], [1], [0, 0, 1, 1], [], []>} : vector<16x32xf32>, vector<32x32xf32>, vector<16x32xf32> -> vector<16x32xf32>
    %109 = vector.broadcast %83 : vector<1x32xf32> to vector<16x32xf32>
    %110 = arith.addf %108, %109 : vector<16x32xf32>
    %111 = arith.addf %110, %72 : vector<16x32xf32>
    %c0_66 = arith.constant 0 : index
    %c4 = arith.constant 4 : index
    %c0_67 = arith.constant 0 : index
    %112 = vector.load %arg11[%c0_66, %c4, %c0_67] : memref<1x9x32xf32, #tpu.memory_space<vmem>>, vector<1x1x32xf32>
    %113 = vector.shape_cast %112 : vector<1x1x32xf32> to vector<1x32xf32>
    %c0_68 = arith.constant 0 : index
    %c5 = arith.constant 5 : index
    %c0_69 = arith.constant 0 : index
    %114 = vector.load %arg11[%c0_68, %c5, %c0_69] : memref<1x9x32xf32, #tpu.memory_space<vmem>>, vector<1x1x32xf32>
    %115 = vector.shape_cast %114 : vector<1x1x32xf32> to vector<1x32xf32>
    %cst_70 = arith.constant dense<0.000000e+00> : vector<16xf32>
    %116 = vector.multi_reduction <add>, %111, %cst_70 [1] : vector<16x32xf32> to vector<16xf32>
    %117 = vector.shape_cast %116 : vector<16xf32> to vector<16x1xf32>
    %cst_71 = arith.constant 3.200000e+01 : f32
    %118 = vector.broadcast %cst_71 : f32 to vector<16x1xf32>
    %119 = arith.divf %117, %118 : vector<16x1xf32>
    %120 = vector.broadcast %119 : vector<16x1xf32> to vector<16x32xf32>
    %121 = arith.subf %111, %120 : vector<16x32xf32>
    %122 = arith.mulf %121, %121 : vector<16x32xf32>
    %cst_72 = arith.constant dense<0.000000e+00> : vector<16xf32>
    %123 = vector.multi_reduction <add>, %122, %cst_72 [1] : vector<16x32xf32> to vector<16xf32>
    %124 = vector.shape_cast %123 : vector<16xf32> to vector<16x1xf32>
    %cst_73 = arith.constant 3.200000e+01 : f32
    %125 = vector.broadcast %cst_73 : f32 to vector<16x1xf32>
    %126 = arith.divf %124, %125 : vector<16x1xf32>
    %127 = vector.broadcast %119 : vector<16x1xf32> to vector<16x32xf32>
    %128 = arith.subf %111, %127 : vector<16x32xf32>
    %cst_74 = arith.constant 9.99999974E-6 : f32
    %129 = vector.broadcast %cst_74 : f32 to vector<16x1xf32>
    %130 = arith.addf %126, %129 : vector<16x1xf32>
    %131 = math.rsqrt %130 : vector<16x1xf32>
    %132 = vector.broadcast %131 : vector<16x1xf32> to vector<16x32xf32>
    %133 = arith.mulf %128, %132 : vector<16x32xf32>
    %134 = vector.broadcast %113 : vector<1x32xf32> to vector<16x32xf32>
    %135 = arith.mulf %133, %134 : vector<16x32xf32>
    %136 = vector.broadcast %115 : vector<1x32xf32> to vector<16x32xf32>
    %137 = arith.addf %135, %136 : vector<16x32xf32>
    %c0_75 = arith.constant 0 : index
    %c0_76 = arith.constant 0 : index
    %c0_77 = arith.constant 0 : index
    %138 = vector.load %arg12[%c0_75, %c0_76, %c0_77] : memref<1x32x128xf32, #tpu.memory_space<vmem>>, vector<1x32x128xf32>
    %139 = vector.shape_cast %138 : vector<1x32x128xf32> to vector<32x128xf32>
    %cst_78 = arith.constant dense<0.000000e+00> : vector<16x128xf32>
    %140 = tpu.matmul %137, %139, %cst_78 {dimension_numbers = #tpu.dot_dimension_numbers<[1], [0], [0], [1], [0, 0, 1, 1], [], []>} : vector<16x32xf32>, vector<32x128xf32>, vector<16x128xf32> -> vector<16x128xf32>
    %c0_79 = arith.constant 0 : index
    %c0_80 = arith.constant 0 : index
    %c0_81 = arith.constant 0 : index
    %141 = vector.load %arg13[%c0_79, %c0_80, %c0_81] : memref<1x1x128xf32, #tpu.memory_space<vmem>>, vector<1x1x128xf32>
    %142 = vector.shape_cast %141 : vector<1x1x128xf32> to vector<1x128xf32>
    %143 = vector.broadcast %142 : vector<1x128xf32> to vector<16x128xf32>
    %144 = arith.addf %140, %143 : vector<16x128xf32>
    %cst_82 = arith.constant 0.000000e+00 : f32
    %145 = vector.broadcast %cst_82 : f32 to vector<16x128xf32>
    %146 = arith.maximumf %144, %145 : vector<16x128xf32>
    %c0_83 = arith.constant 0 : index
    %c0_84 = arith.constant 0 : index
    %c0_85 = arith.constant 0 : index
    %147 = vector.load %arg14[%c0_83, %c0_84, %c0_85] : memref<1x128x32xf32, #tpu.memory_space<vmem>>, vector<1x128x32xf32>
    %148 = vector.shape_cast %147 : vector<1x128x32xf32> to vector<128x32xf32>
    %cst_86 = arith.constant dense<0.000000e+00> : vector<16x32xf32>
    %149 = tpu.matmul %146, %148, %cst_86 {dimension_numbers = #tpu.dot_dimension_numbers<[1], [0], [0], [1], [0, 0, 1, 1], [], []>} : vector<16x128xf32>, vector<128x32xf32>, vector<16x32xf32> -> vector<16x32xf32>
    %c0_87 = arith.constant 0 : index
    %c6 = arith.constant 6 : index
    %c0_88 = arith.constant 0 : index
    %150 = vector.load %arg11[%c0_87, %c6, %c0_88] : memref<1x9x32xf32, #tpu.memory_space<vmem>>, vector<1x1x32xf32>
    %151 = vector.shape_cast %150 : vector<1x1x32xf32> to vector<1x32xf32>
    %152 = vector.broadcast %151 : vector<1x32xf32> to vector<16x32xf32>
    %153 = arith.addf %149, %152 : vector<16x32xf32>
    %154 = arith.addf %153, %137 : vector<16x32xf32>
    %c0_89 = arith.constant 0 : index
    %c7 = arith.constant 7 : index
    %c0_90 = arith.constant 0 : index
    %155 = vector.load %arg11[%c0_89, %c7, %c0_90] : memref<1x9x32xf32, #tpu.memory_space<vmem>>, vector<1x1x32xf32>
    %156 = vector.shape_cast %155 : vector<1x1x32xf32> to vector<1x32xf32>
    %c0_91 = arith.constant 0 : index
    %c8 = arith.constant 8 : index
    %c0_92 = arith.constant 0 : index
    %157 = vector.load %arg11[%c0_91, %c8, %c0_92] : memref<1x9x32xf32, #tpu.memory_space<vmem>>, vector<1x1x32xf32>
    %158 = vector.shape_cast %157 : vector<1x1x32xf32> to vector<1x32xf32>
    %cst_93 = arith.constant dense<0.000000e+00> : vector<16xf32>
    %159 = vector.multi_reduction <add>, %154, %cst_93 [1] : vector<16x32xf32> to vector<16xf32>
    %160 = vector.shape_cast %159 : vector<16xf32> to vector<16x1xf32>
    %cst_94 = arith.constant 3.200000e+01 : f32
    %161 = vector.broadcast %cst_94 : f32 to vector<16x1xf32>
    %162 = arith.divf %160, %161 : vector<16x1xf32>
    %163 = vector.broadcast %162 : vector<16x1xf32> to vector<16x32xf32>
    %164 = arith.subf %154, %163 : vector<16x32xf32>
    %165 = arith.mulf %164, %164 : vector<16x32xf32>
    %cst_95 = arith.constant dense<0.000000e+00> : vector<16xf32>
    %166 = vector.multi_reduction <add>, %165, %cst_95 [1] : vector<16x32xf32> to vector<16xf32>
    %167 = vector.shape_cast %166 : vector<16xf32> to vector<16x1xf32>
    %cst_96 = arith.constant 3.200000e+01 : f32
    %168 = vector.broadcast %cst_96 : f32 to vector<16x1xf32>
    %169 = arith.divf %167, %168 : vector<16x1xf32>
    %170 = vector.broadcast %162 : vector<16x1xf32> to vector<16x32xf32>
    %171 = arith.subf %154, %170 : vector<16x32xf32>
    %cst_97 = arith.constant 9.99999974E-6 : f32
    %172 = vector.broadcast %cst_97 : f32 to vector<16x1xf32>
    %173 = arith.addf %169, %172 : vector<16x1xf32>
    %174 = math.rsqrt %173 : vector<16x1xf32>
    %175 = vector.broadcast %174 : vector<16x1xf32> to vector<16x32xf32>
    %176 = arith.mulf %171, %175 : vector<16x32xf32>
    %177 = vector.broadcast %156 : vector<1x32xf32> to vector<16x32xf32>
    %178 = arith.mulf %176, %177 : vector<16x32xf32>
    %179 = vector.broadcast %158 : vector<1x32xf32> to vector<16x32xf32>
    %180 = arith.addf %178, %179 : vector<16x32xf32>
    %c0_98 = arith.constant 0 : index
    %c0_99 = arith.constant 0 : index
    %181 = vector.load %arg18[%c0_98, %c0_99] : memref<16x32xf32, #tpu.memory_space<vmem>>, vector<16x32xf32>
    tpu.vector_store %arg18[%c0_98, %c0_99], %180 {strides = array<i32>} : memref<16x32xf32, #tpu.memory_space<vmem>>, vector<16x32xf32>,
    %c1_i32 = arith.constant 1 : i32
    %182 = arith.cmpi eq, %arg0, %c1_i32 : i32
    %183 = arith.extui %182 : i1 to i32
    %c0_i32_100 = arith.constant 0 : i32
    %184 = arith.cmpi ne, %183, %c0_i32_100 : i32
    scf.if %184 {
      %c0_101 = arith.constant 0 : index
      %c0_102 = arith.constant 0 : index
      %185 = vector.load %arg15[%c0_101, %c0_102] : memref<32x128xf32, #tpu.memory_space<vmem>>, vector<32x128xf32>
      %cst_103 = arith.constant dense<0.000000e+00> : vector<16x128xf32>
      %186 = tpu.matmul %180, %185, %cst_103 {dimension_numbers = #tpu.dot_dimension_numbers<[1], [0], [0], [1], [0, 0, 1, 1], [], []>} : vector<16x32xf32>, vector<32x128xf32>, vector<16x128xf32> -> vector<16x128xf32>
      %c0_104 = arith.constant 0 : index
      %c0_105 = arith.constant 0 : index
      %187 = vector.load %arg16[%c0_104, %c0_105] : memref<1x128xf32, #tpu.memory_space<vmem>>, vector<1x128xf32>
      %188 = vector.broadcast %187 : vector<1x128xf32> to vector<16x128xf32>
      %189 = arith.addf %186, %188 : vector<16x128xf32>
      %c0_106 = arith.constant 0 : index
      %c0_107 = arith.constant 0 : index
      %190 = vector.load %arg17[%c0_106, %c0_107] : memref<16x128xf32, #tpu.memory_space<vmem>>, vector<16x128xf32>
      tpu.vector_store %arg17[%c0_106, %c0_107], %189 {strides = array<i32>} : memref<16x128xf32, #tpu.memory_space<vmem>>, vector<16x128xf32>,
    } else {
    }
    return
  }
  func.func @transform_0(%arg0: i32) -> (i32, i32) {
    %c0_i32 = arith.constant 0 : i32
    %c0_i32_0 = arith.constant 0 : i32
    %c0_i32_1 = arith.constant 0 : i32
    return %c0_i32, %c0_i32_0 : i32, i32
  }
  func.func @transform_1(%arg0: i32) -> (i32, i32) {
    %c0_i32 = arith.constant 0 : i32
    %c0_i32_0 = arith.constant 0 : i32
    %c0_i32_1 = arith.constant 0 : i32
    return %c0_i32, %c0_i32_0 : i32, i32
  }
  func.func @transform_2(%arg0: i32) -> (i32, i32) {
    %c0_i32 = arith.constant 0 : i32
    %c0_i32_0 = arith.constant 0 : i32
    %c0_i32_1 = arith.constant 0 : i32
    return %c0_i32, %c0_i32_0 : i32, i32
  }
  func.func @transform_3(%arg0: i32) -> (i32, i32) {
    %c0_i32 = arith.constant 0 : i32
    %c0_i32_0 = arith.constant 0 : i32
    %c0_i32_1 = arith.constant 0 : i32
    return %c0_i32, %c0_i32_0 : i32, i32
  }
  func.func @transform_4(%arg0: i32) -> (i32, i32) {
    %c0_i32 = arith.constant 0 : i32
    %c0_i32_0 = arith.constant 0 : i32
    %c0_i32_1 = arith.constant 0 : i32
    return %c0_i32, %c0_i32_0 : i32, i32
  }
  func.func @transform_5(%arg0: i32) -> (i32, i32) {
    %c0_i32 = arith.constant 0 : i32
    %c0_i32_0 = arith.constant 0 : i32
    %c0_i32_1 = arith.constant 0 : i32
    return %c0_i32, %c0_i32_0 : i32, i32
  }
  func.func @transform_6(%arg0: i32) -> (i32, i32) {
    %c0_i32 = arith.constant 0 : i32
    %c0_i32_0 = arith.constant 0 : i32
    %c0_i32_1 = arith.constant 0 : i32
    return %c0_i32, %c0_i32_0 : i32, i32
  }
  func.func @transform_7(%arg0: i32) -> (i32, i32) {
    %c0_i32 = arith.constant 0 : i32
    %c0_i32_0 = arith.constant 0 : i32
    %c0_i32_1 = arith.constant 0 : i32
    return %c0_i32, %c0_i32_0 : i32, i32
  }
  func.func @transform_8(%arg0: i32) -> (i32, i32) {
    %c0_i32 = arith.constant 0 : i32
    %c0_i32_0 = arith.constant 0 : i32
    %c0_i32_1 = arith.constant 0 : i32
    return %c0_i32, %c0_i32_0 : i32, i32
  }
  func.func @transform_9(%arg0: i32) -> (i32, i32, i32) {
    %c0_i32 = arith.constant 0 : i32
    %c0_i32_0 = arith.constant 0 : i32
    %c0_i32_1 = arith.constant 0 : i32
    return %arg0, %c0_i32, %c0_i32_0 : i32, i32, i32
  }
  func.func @transform_10(%arg0: i32) -> (i32, i32, i32) {
    %c0_i32 = arith.constant 0 : i32
    %c0_i32_0 = arith.constant 0 : i32
    %c0_i32_1 = arith.constant 0 : i32
    return %arg0, %c0_i32, %c0_i32_0 : i32, i32, i32
  }
  func.func @transform_11(%arg0: i32) -> (i32, i32, i32) {
    %c0_i32 = arith.constant 0 : i32
    %c0_i32_0 = arith.constant 0 : i32
    %c0_i32_1 = arith.constant 0 : i32
    return %arg0, %c0_i32, %c0_i32_0 : i32, i32, i32
  }
  func.func @transform_12(%arg0: i32) -> (i32, i32, i32) {
    %c0_i32 = arith.constant 0 : i32
    %c0_i32_0 = arith.constant 0 : i32
    %c0_i32_1 = arith.constant 0 : i32
    return %arg0, %c0_i32, %c0_i32_0 : i32, i32, i32
  }
  func.func @transform_13(%arg0: i32) -> (i32, i32, i32) {
    %c0_i32 = arith.constant 0 : i32
    %c0_i32_0 = arith.constant 0 : i32
    %c0_i32_1 = arith.constant 0 : i32
    return %arg0, %c0_i32, %c0_i32_0 : i32, i32, i32
  }
  func.func @transform_14(%arg0: i32) -> (i32, i32) {
    %c0_i32 = arith.constant 0 : i32
    %c0_i32_0 = arith.constant 0 : i32
    %c0_i32_1 = arith.constant 0 : i32
    return %c0_i32, %c0_i32_0 : i32, i32
  }
  func.func @transform_15(%arg0: i32) -> (i32, i32) {
    %c0_i32 = arith.constant 0 : i32
    %c0_i32_0 = arith.constant 0 : i32
    %c0_i32_1 = arith.constant 0 : i32
    return %c0_i32, %c0_i32_0 : i32, i32
  }
  func.func @transform_16(%arg0: i32) -> (i32, i32) {
    %c0_i32 = arith.constant 0 : i32
    %c0_i32_0 = arith.constant 0 : i32
    %c0_i32_1 = arith.constant 0 : i32
    return %c0_i32, %c0_i32_0 : i32, i32
  }
}

</mosaic_0001>

<llo_original>
// kernel: eq.1
$region0: #{eq.1}
  %s0 = inlined_call_operand.hbm [shape: s32[2,8], index: 0, kind: input, shape index: {}]
  %s1 = inlined_call_operand.vmem [shape: s32[16], index: 1, kind: output, shape index: {}]
  $region1: #{eq.1} parent=0
    #allocation0 [shape = 'u8[1024]{0}', space=vmem, size = 0x400, scoped, tag = 'operand span for operand 0']
    #allocation1 [shape = 's32[1]{0}', space=sflag, size = 0x4, scoped, tag = 'scoped memory for eq.1']
    #allocation2 [shape = 'u8[4096]{0}', space=vmem, size = 0x1000, scoped, tag = 'scoped mem for output reshape']
    #allocation3 [shape = 'u8[4096]{0}', space=vmem, size = 0x1000, scoped, tag = 'scoped mem for input reshape']
    %2 = vsyncpa [#allocation1], 0
    %4 = vsyncadd [#allocation1], 0
    %s6 = sshll.u32 %s0, 4
    %s7 = int_to_ptr.hbm [resolvable:$true] %s6
    %s8 = sshll.u32 [#allocation0], 4
    %s9 = int_to_ptr.vmem [resolvable:$true] %s8
    %11 = dma.hbm_to_vmem [thread:$0]  %s7, 32, %s9, [#allocation1]
    %13 = dma.done [#allocation1], 32
    %s15 = ssub.s32 4, 1
    %v16 = vld [vmem:[#allocation0] sm:%s15]
    %17 = vst [vmem:[#allocation3] sm:%s15] %v16
    %v18 = vld [vmem:[#allocation3] sm:$0x1]
    %vm19 = vcmask 64512
    %20 = vst.msk [vmem:[#allocation2] sm:$0x1] %vm19, %v18
    %s21 = scalar_lea.vmem [#allocation3], 1
    %v22 = vld [vmem:[%s21] sm:$0x1]
    %23 = vrot.lane.b32.xlu0 %v22, 8
    %v24 = vpop.permute.xlu0 %23
    %vm25 = vcmask 130112
    %26 = vst.msk [vmem:[#allocation2] sm:$0x1] %vm25, %v24
    %s28 = ssub.s32 2, 1
    %v29 = vld [vmem:[#allocation2] sm:%s28]
    %s31 = ssub.s32 2, 1
    %32 = vst [vmem:[%s1] sm:%s31] %v29
    %33 = vsyncpa [#allocation1], 1

// kernel: decoder_forward.1
$region0: #{decoder_forward.1}
  #allocation0 [shape = 'u32[]', space=smem, size = 0x4, offset = 0x4, fixed_abs, tag = 'smem constant byte address 0x4 - core index']
  #allocation1 [shape = 'u32[72,128]{1,0:T(1,128)}', space=vmem, size = 0x9000, scoped, tag = 'internal scratch']
  #allocation2 [shape = 'f32[16,32]{1,0:T(8,128)}', space=vmem, size = 0x2000, scoped, tag = 'scratch operand']
  %s0 = inlined_call_operand.vmem [shape: f32[16,128], index: 0, kind: input, shape index: {}]
  %s1 = inlined_call_operand.vmem [shape: f32[128,32], index: 1, kind: input, shape index: {}]
  %s2 = inlined_call_operand.vmem [shape: f32[16,32], index: 2, kind: input, shape index: {}]
  %s3 = inlined_call_operand.vmem [shape: f32[16,32], index: 3, kind: input, shape index: {}]
  %s4 = inlined_call_operand.vmem [shape: f32[64,16], index: 4, kind: input, shape index: {}]
  %s5 = inlined_call_operand.vmem [shape: f32[16,64], index: 5, kind: input, shape index: {}]
  %s6 = inlined_call_operand.vmem [shape: f32[64,32], index: 6, kind: input, shape index: {}]
  %s7 = inlined_call_operand.vmem [shape: f32[64,16], index: 7, kind: input, shape index: {}]
  %s8 = inlined_call_operand.vmem [shape: f32[64,16], index: 8, kind: input, shape index: {}]
  %s9 = inlined_call_operand.vmem [shape: f32[2,256,32], index: 9, kind: input, shape index: {}]
  %s10 = inlined_call_operand.vmem [shape: f32[2,9,32], index: 10, kind: input, shape index: {}]
  %s11 = inlined_call_operand.vmem [shape: f32[2,32,128], index: 11, kind: input, shape index: {}]
  %s12 = inlined_call_operand.vmem [shape: f32[2,1,128], index: 12, kind: input, shape index: {}]
  %s13 = inlined_call_operand.vmem [shape: f32[2,128,32], index: 13, kind: input, shape index: {}]
  %s14 = inlined_call_operand.vmem [shape: f32[32,128], index: 14, kind: input, shape index: {}]
  %s15 = inlined_call_operand.vmem [shape: f32[1,128], index: 15, kind: input, shape index: {}]
  %s16 = inlined_call_operand.hbm [shape: f32[16,128], index: 16, kind: output, shape index: {}]
  %s17 = sld [smem:[#allocation0]]
  $region105: #{decoder_forward.1} parent=0
    _
  %s19 = ssub.s32 1, %s17
  %s20 = scalar_select 0, %s19, %s17
  $region1: #{decoder_forward.1} parent=0
    #allocation3 [shape = 'u8[8192]{0}', space=vmem, size = 0x2000, scoped, tag = 'output window, operand 0, single buffered']
    #allocation4 [shape = 's32[2]{0}', space=sflag, size = 0x8, scoped, tag = 'scoped memory for decoder_forward.1']
    %21 = vsyncpa [#allocation4], 0
    loop: start=0, step=1, limit=4
    $region2: #{decoder_forward.1} parent=1 // loop_pre_header
      _
    $region3: #{decoder_forward.1} parent=1 // loop_header
      %s23 = sphi 0, %s27
      %p24 = scmp.ge.s32.totalorder %s23, 4
      %s31 = sphi 0, %s31
      %s33 = sphi 0, %s31
      %s34 = sphi 0, %s33
      %s48 = sphi 0, %s34
      %s52 = sphi 0, %s52
      %s54 = sphi 0, %s52
      %s55 = sphi 0, %s54
      %s69 = sphi 0, %s55
      %s73 = sphi 0, %s73
      %s75 = sphi 0, %s73
      %s76 = sphi 0, %s75
      %s90 = sphi 0, %s76
      %s94 = sphi 0, %s94
      %s96 = sphi 0, %s94
      %s97 = sphi 0, %s96
      %s111 = sphi 0, %s97
      %s115 = sphi 0, %s115
      %s117 = sphi 0, %s115
      %s118 = sphi 0, %s117
      %s132 = sphi 0, %s118
      %s136 = sphi 0, %s136
      %s138 = sphi 0, %s136
      %s139 = sphi 0, %s138
      %s153 = sphi 0, %s139
      %s157 = sphi 0, %s157
      %s159 = sphi 0, %s157
      %s160 = sphi 0, %s159
      %s174 = sphi 0, %s160
      %s178 = sphi 0, %s178
      %s180 = sphi 0, %s178
      %s181 = sphi 0, %s180
      %s195 = sphi 0, %s181
      %s199 = sphi 0, %s199
      %s201 = sphi 0, %s199
      %s202 = sphi 0, %s201
      %s216 = sphi 0, %s202
      %s222 = sphi 0, %s224
      %s225 = sphi 0, %s222
      %s226 = sphi 0, %s225
      %s242 = sphi 0, %s226
      %s248 = sphi 0, %s250
      %s251 = sphi 0, %s248
      %s252 = sphi 0, %s251
      %s268 = sphi 0, %s252
      %s274 = sphi 0, %s276
      %s277 = sphi 0, %s274
      %s278 = sphi 0, %s277
      %s294 = sphi 0, %s278
      %s300 = sphi 0, %s302
      %s303 = sphi 0, %s300
      %s304 = sphi 0, %s303
      %s320 = sphi 0, %s304
      %s326 = sphi 0, %s328
      %s329 = sphi 0, %s326
      %s330 = sphi 0, %s329
      %s346 = sphi 0, %s330
      %s350 = sphi 0, %s350
      %s352 = sphi 0, %s350
      %s353 = sphi 0, %s352
      %s367 = sphi 0, %s353
      %s371 = sphi 0, %s371
      %s373 = sphi 0, %s371
      %s374 = sphi 0, %s373
      %s388 = sphi 0, %s374
      %s392 = sphi 0, %s392
      %s394 = sphi 0, %s392
      %s395 = sphi 0, %s394
      %s409 = sphi 0, %s395
    $region4: #{decoder_forward.1} parent=1 // loop_header_branch
      %26 = sbr.rel (%p24) target = $region8
    $region5: #{decoder_forward.1} parent=1 // loop_body
      %s28 = ssub.s32 %s23, 1
      %s29 = ssub.s32 %s23, 2
      %s30 = sadd.s32 %s23, 1
      %s32 = sadd.s32 %s31, 1
      %p35 = scmp.eq.s32.totalorder %s23, 1
      %p36 = scmp.ne.s32.totalorder %s31, %s33
      %p37 = scmp.eq.s32.totalorder %s23, 0
      %p38 = por %p36, %p37
      %p39 = scmp.ne.s32.totalorder %s31, %s33
      %p40 = scmp.eq.s32.totalorder %s28, 1
      %p41 = por %p39, %p40
      %p42 = scmp.ne.s32.totalorder %s33, %s34
      %p43 = scmp.eq.s32.totalorder %s28, 0
      %p44 = por %p42, %p43
      %p45 = scmp.ne.s32.totalorder %s33, %s34
      %p46 = scmp.eq.s32.totalorder %s29, 1
      %p47 = por %p45, %p46
      %p49 = scmp.ne.s32.totalorder %s34, %s48
      %p50 = scmp.eq.s32.totalorder %s29, 0
      %p51 = por %p49, %p50
      %s53 = sadd.s32 %s52, 1
      %p56 = scmp.eq.s32.totalorder %s23, 1
      %p57 = scmp.ne.s32.totalorder %s52, %s54
      %p58 = scmp.eq.s32.totalorder %s23, 0
      %p59 = por %p57, %p58
      %p60 = scmp.ne.s32.totalorder %s52, %s54
      %p61 = scmp.eq.s32.totalorder %s28, 1
      %p62 = por %p60, %p61
      %p63 = scmp.ne.s32.totalorder %s54, %s55
      %p64 = scmp.eq.s32.totalorder %s28, 0
      %p65 = por %p63, %p64
      %p66 = scmp.ne.s32.totalorder %s54, %s55
      %p67 = scmp.eq.s32.totalorder %s29, 1
      %p68 = por %p66, %p67
      %p70 = scmp.ne.s32.totalorder %s55, %s69
      %p71 = scmp.eq.s32.totalorder %s29, 0
      %p72 = por %p70, %p71
      %s74 = sadd.s32 %s73, 1
      %p77 = scmp.eq.s32.totalorder %s23, 1
      %p78 = scmp.ne.s32.totalorder %s73, %s75
      %p79 = scmp.eq.s32.totalorder %s23, 0
      %p80 = por %p78, %p79
      %p81 = scmp.ne.s32.totalorder %s73, %s75
      %p82 = scmp.eq.s32.totalorder %s28, 1
      %p83 = por %p81, %p82
      %p84 = scmp.ne.s32.totalorder %s75, %s76
      %p85 = scmp.eq.s32.totalorder %s28, 0
      %p86 = por %p84, %p85
      %p87 = scmp.ne.s32.totalorder %s75, %s76
      %p88 = scmp.eq.s32.totalorder %s29, 1
      %p89 = por %p87, %p88
      %p91 = scmp.ne.s32.totalorder %s76, %s90
      %p92 = scmp.eq.s32.totalorder %s29, 0
      %p93 = por %p91, %p92
      %s95 = sadd.s32 %s94, 1
      %p98 = scmp.eq.s32.totalorder %s23, 1
      %p99 = scmp.ne.s32.totalorder %s94, %s96
      %p100 = scmp.eq.s32.totalorder %s23, 0
      %p101 = por %p99, %p100
      %p102 = scmp.ne.s32.totalorder %s94, %s96
      %p103 = scmp.eq.s32.totalorder %s28, 1
      %p104 = por %p102, %p103
      %p105 = scmp.ne.s32.totalorder %s96, %s97
      %p106 = scmp.eq.s32.totalorder %s28, 0
      %p107 = por %p105, %p106
      %p108 = scmp.ne.s32.totalorder %s96, %s97
      %p109 = scmp.eq.s32.totalorder %s29, 1
      %p110 = por %p108, %p109
      %p112 = scmp.ne.s32.totalorder %s97, %s111
      %p113 = scmp.eq.s32.totalorder %s29, 0
      %p114 = por %p112, %p113
      %s116 = sadd.s32 %s115, 1
      %p119 = scmp.eq.s32.totalorder %s23, 1
      %p120 = scmp.ne.s32.totalorder %s115, %s117
      %p121 = scmp.eq.s32.totalorder %s23, 0
      %p122 = por %p120, %p121
      %p123 = scmp.ne.s32.totalorder %s115, %s117
      %p124 = scmp.eq.s32.totalorder %s28, 1
      %p125 = por %p123, %p124
      %p126 = scmp.ne.s32.totalorder %s117, %s118
      %p127 = scmp.eq.s32.totalorder %s28, 0
      %p128 = por %p126, %p127
      %p129 = scmp.ne.s32.totalorder %s117, %s118
      %p130 = scmp.eq.s32.totalorder %s29, 1
      %p131 = por %p129, %p130
      %p133 = scmp.ne.s32.totalorder %s118, %s132
      %p134 = scmp.eq.s32.totalorder %s29, 0
      %p135 = por %p133, %p134
      %s137 = sadd.s32 %s136, 1
      %p140 = scmp.eq.s32.totalorder %s23, 1
      %p141 = scmp.ne.s32.totalorder %s136, %s138
      %p142 = scmp.eq.s32.totalorder %s23, 0
      %p143 = por %p141, %p142
      %p144 = scmp.ne.s32.totalorder %s136, %s138
      %p145 = scmp.eq.s32.totalorder %s28, 1
      %p146 = por %p144, %p145
      %p147 = scmp.ne.s32.totalorder %s138, %s139
      %p148 = scmp.eq.s32.totalorder %s28, 0
      %p149 = por %p147, %p148
      %p150 = scmp.ne.s32.totalorder %s138, %s139
      %p151 = scmp.eq.s32.totalorder %s29, 1
      %p152 = por %p150, %p151
      %p154 = scmp.ne.s32.totalorder %s139, %s153
      %p155 = scmp.eq.s32.totalorder %s29, 0
      %p156 = por %p154, %p155
      %s158 = sadd.s32 %s157, 1
      %p161 = scmp.eq.s32.totalorder %s23, 1
      %p162 = scmp.ne.s32.totalorder %s157, %s159
      %p163 = scmp.eq.s32.totalorder %s23, 0
      %p164 = por %p162, %p163
      %p165 = scmp.ne.s32.totalorder %s157, %s159
      %p166 = scmp.eq.s32.totalorder %s28, 1
      %p167 = por %p165, %p166
      %p168 = scmp.ne.s32.totalorder %s159, %s160
      %p169 = scmp.eq.s32.totalorder %s28, 0
      %p170 = por %p168, %p169
      %p171 = scmp.ne.s32.totalorder %s159, %s160
      %p172 = scmp.eq.s32.totalorder %s29, 1
      %p173 = por %p171, %p172
      %p175 = scmp.ne.s32.totalorder %s160, %s174
      %p176 = scmp.eq.s32.totalorder %s29, 0
      %p177 = por %p175, %p176
      %s179 = sadd.s32 %s178, 1
      %p182 = scmp.eq.s32.totalorder %s23, 1
      %p183 = scmp.ne.s32.totalorder %s178, %s180
      %p184 = scmp.eq.s32.totalorder %s23, 0
      %p185 = por %p183, %p184
      %p186 = scmp.ne.s32.totalorder %s178, %s180
      %p187 = scmp.eq.s32.totalorder %s28, 1
      %p188 = por %p186, %p187
      %p189 = scmp.ne.s32.totalorder %s180, %s181
      %p190 = scmp.eq.s32.totalorder %s28, 0
      %p191 = por %p189, %p190
      %p192 = scmp.ne.s32.totalorder %s180, %s181
      %p193 = scmp.eq.s32.totalorder %s29, 1
      %p194 = por %p192, %p193
      %p196 = scmp.ne.s32.totalorder %s181, %s195
      %p197 = scmp.eq.s32.totalorder %s29, 0
      %p198 = por %p196, %p197
      %s200 = sadd.s32 %s199, 1
      %p203 = scmp.eq.s32.totalorder %s23, 1
      %p204 = scmp.ne.s32.totalorder %s199, %s201
      %p205 = scmp.eq.s32.totalorder %s23, 0
      %p206 = por %p204, %p205
      %p207 = scmp.ne.s32.totalorder %s199, %s201
      %p208 = scmp.eq.s32.totalorder %s28, 1
      %p209 = por %p207, %p208
      %p210 = scmp.ne.s32.totalorder %s201, %s202
      %p211 = scmp.eq.s32.totalorder %s28, 0
      %p212 = por %p210, %p211
      %p213 = scmp.ne.s32.totalorder %s201, %s202
      %p214 = scmp.eq.s32.totalorder %s29, 1
      %p215 = por %p213, %p214
      %p217 = scmp.ne.s32.totalorder %s202, %s216
      %p218 = scmp.eq.s32.totalorder %s29, 0
      %p219 = por %p217, %p218
      %s220 = ssub.s32 %s23, %s30
      %p221 = scmp.eq.s32.totalorder %s220, 0
      %s223 = sadd.s32 %s222, 1
      %s224 = scalar_select %p221, %s222, %s223
      %p227 = pneg %p221
      %p228 = scmp.eq.s32.totalorder %s23, 1
      %p229 = por %p227, %p228
      %p230 = scmp.ne.s32.totalorder %s222, %s225
      %p231 = scmp.eq.s32.totalorder %s23, 0
      %p232 = por %p230, %p231
      %p233 = scmp.ne.s32.totalorder %s222, %s225
      %p234 = scmp.eq.s32.totalorder %s28, 1
      %p235 = por %p233, %p234
      %p236 = scmp.ne.s32.totalorder %s225, %s226
      %p237 = scmp.eq.s32.totalorder %s28, 0
      %p238 = por %p236, %p237
      %p239 = scmp.ne.s32.totalorder %s225, %s226
      %p240 = scmp.eq.s32.totalorder %s29, 1
      %p241 = por %p239, %p240
      %p243 = scmp.ne.s32.totalorder %s226, %s242
      %p244 = scmp.eq.s32.totalorder %s29, 0
      %p245 = por %p243, %p244
      %s246 = ssub.s32 %s23, %s30
      %p247 = scmp.eq.s32.totalorder %s246, 0
      %s249 = sadd.s32 %s248, 1
      %s250 = scalar_select %p247, %s248, %s249
      %p253 = pneg %p247
      %p254 = scmp.eq.s32.totalorder %s23, 1
      %p255 = por %p253, %p254
      %p256 = scmp.ne.s32.totalorder %s248, %s251
      %p257 = scmp.eq.s32.totalorder %s23, 0
      %p258 = por %p256, %p257
      %p259 = scmp.ne.s32.totalorder %s248, %s251
      %p260 = scmp.eq.s32.totalorder %s28, 1
      %p261 = por %p259, %p260
      %p262 = scmp.ne.s32.totalorder %s251, %s252
      %p263 = scmp.eq.s32.totalorder %s28, 0
      %p264 = por %p262, %p263
      %p265 = scmp.ne.s32.totalorder %s251, %s252
      %p266 = scmp.eq.s32.totalorder %s29, 1
      %p267 = por %p265, %p266
      %p269 = scmp.ne.s32.totalorder %s252, %s268
      %p270 = scmp.eq.s32.totalorder %s29, 0
      %p271 = por %p269, %p270
      %s272 = ssub.s32 %s23, %s30
      %p273 = scmp.eq.s32.totalorder %s272, 0
      %s275 = sadd.s32 %s274, 1
      %s276 = scalar_select %p273, %s274, %s275
      %p279 = pneg %p273
      %p280 = scmp.eq.s32.totalorder %s23, 1
      %p281 = por %p279, %p280
      %p282 = scmp.ne.s32.totalorder %s274, %s277
      %p283 = scmp.eq.s32.totalorder %s23, 0
      %p284 = por %p282, %p283
      %p285 = scmp.ne.s32.totalorder %s274, %s277
      %p286 = scmp.eq.s32.totalorder %s28, 1
      %p287 = por %p285, %p286
      %p288 = scmp.ne.s32.totalorder %s277, %s278
      %p289 = scmp.eq.s32.totalorder %s28, 0
      %p290 = por %p288, %p289
      %p291 = scmp.ne.s32.totalorder %s277, %s278
      %p292 = scmp.eq.s32.totalorder %s29, 1
      %p293 = por %p291, %p292
      %p295 = scmp.ne.s32.totalorder %s278, %s294
      %p296 = scmp.eq.s32.totalorder %s29, 0
      %p297 = por %p295, %p296
      %s298 = ssub.s32 %s23, %s30
      %p299 = scmp.eq.s32.totalorder %s298, 0
      %s301 = sadd.s32 %s300, 1
      %s302 = scalar_select %p299, %s300, %s301
      %p305 = pneg %p299
      %p306 = scmp.eq.s32.totalorder %s23, 1
      %p307 = por %p305, %p306
      %p308 = scmp.ne.s32.totalorder %s300, %s303
      %p309 = scmp.eq.s32.totalorder %s23, 0
      %p310 = por %p308, %p309
      %p311 = scmp.ne.s32.totalorder %s300, %s303
      %p312 = scmp.eq.s32.totalorder %s28, 1
      %p313 = por %p311, %p312
      %p314 = scmp.ne.s32.totalorder %s303, %s304
      %p315 = scmp.eq.s32.totalorder %s28, 0
      %p316 = por %p314, %p315
      %p317 = scmp.ne.s32.totalorder %s303, %s304
      %p318 = scmp.eq.s32.totalorder %s29, 1
      %p319 = por %p317, %p318
      %p321 = scmp.ne.s32.totalorder %s304, %s320
      %p322 = scmp.eq.s32.totalorder %s29, 0
      %p323 = por %p321, %p322
      %s324 = ssub.s32 %s23, %s30
      %p325 = scmp.eq.s32.totalorder %s324, 0
      %s327 = sadd.s32 %s326, 1
      %s328 = scalar_select %p325, %s326, %s327
      %p331 = pneg %p325
      %p332 = scmp.eq.s32.totalorder %s23, 1
      %p333 = por %p331, %p332
      %p334 = scmp.ne.s32.totalorder %s326, %s329
      %p335 = scmp.eq.s32.totalorder %s23, 0
      %p336 = por %p334, %p335
      %p337 = scmp.ne.s32.totalorder %s326, %s329
      %p338 = scmp.eq.s32.totalorder %s28, 1
      %p339 = por %p337, %p338
      %p340 = scmp.ne.s32.totalorder %s329, %s330
      %p341 = scmp.eq.s32.totalorder %s28, 0
      %p342 = por %p340, %p341
      %p343 = scmp.ne.s32.totalorder %s329, %s330
      %p344 = scmp.eq.s32.totalorder %s29, 1
      %p345 = por %p343, %p344
      %p347 = scmp.ne.s32.totalorder %s330, %s346
      %p348 = scmp.eq.s32.totalorder %s29, 0
      %p349 = por %p347, %p348
      %s351 = sadd.s32 %s350, 1
      %p354 = scmp.eq.s32.totalorder %s23, 1
      %p355 = scmp.ne.s32.totalorder %s350, %s352
      %p356 = scmp.eq.s32.totalorder %s23, 0
      %p357 = por %p355, %p356
      %p358 = scmp.ne.s32.totalorder %s350, %s352
      %p359 = scmp.eq.s32.totalorder %s28, 1
      %p360 = por %p358, %p359
      %p361 = scmp.ne.s32.totalorder %s352, %s353
      %p362 = scmp.eq.s32.totalorder %s28, 0
      %p363 = por %p361, %p362
      %p364 = scmp.ne.s32.totalorder %s352, %s353
      %p365 = scmp.eq.s32.totalorder %s29, 1
      %p366 = por %p364, %p365
      %p368 = scmp.ne.s32.totalorder %s353, %s367
      %p369 = scmp.eq.s32.totalorder %s29, 0
      %p370 = por %p368, %p369
      %s372 = sadd.s32 %s371, 1
      %p375 = scmp.eq.s32.totalorder %s23, 1
      %p376 = scmp.ne.s32.totalorder %s371, %s373
      %p377 = scmp.eq.s32.totalorder %s23, 0
      %p378 = por %p376, %p377
      %p379 = scmp.ne.s32.totalorder %s371, %s373
      %p380 = scmp.eq.s32.totalorder %s28, 1
      %p381 = por %p379, %p380
      %p382 = scmp.ne.s32.totalorder %s373, %s374
      %p383 = scmp.eq.s32.totalorder %s28, 0
      %p384 = por %p382, %p383
      %p385 = scmp.ne.s32.totalorder %s373, %s374
      %p386 = scmp.eq.s32.totalorder %s29, 1
      %p387 = por %p385, %p386
      %p389 = scmp.ne.s32.totalorder %s374, %s388
      %p390 = scmp.eq.s32.totalorder %s29, 0
      %p391 = por %p389, %p390
      %s393 = sadd.s32 %s392, 1
      %p396 = scmp.eq.s32.totalorder %s23, 1
      %p397 = scmp.ne.s32.totalorder %s392, %s394
      %p398 = scmp.eq.s32.totalorder %s23, 0
      %p399 = por %p397, %p398
      %p400 = scmp.ne.s32.totalorder %s392, %s394
      %p401 = scmp.eq.s32.totalorder %s28, 1
      %p402 = por %p400, %p401
      %p403 = scmp.ne.s32.totalorder %s394, %s395
      %p404 = scmp.eq.s32.totalorder %s28, 0
      %p405 = por %p403, %p404
      %p406 = scmp.ne.s32.totalorder %s394, %s395
      %p407 = scmp.eq.s32.totalorder %s29, 1
      %p408 = por %p406, %p407
      %p410 = scmp.ne.s32.totalorder %s395, %s409
      %p411 = scmp.eq.s32.totalorder %s29, 0
      %p412 = por %p410, %p411
      %p413 = scmp.le.s32.totalorder 1, %s23
      %p414 = scmp.lt.s32.totalorder %s23, 3
      %p415 = pnand %p413, %p414
      %p416 = pneg %p415
      // Predicated region
      $region9: #{decoder_forward.1} parent=5 // pred_check
        _
      $region10: #{decoder_forward.1} parent=5 // pred_check_branch
        %418 = sbr.rel (%p415) target = $region12
      $region11: #{decoder_forward.1} parent=5 // pred_region
        %s419 = ssub.s32 %s23, 1
        // Predicated region
        $region13: #{decoder_forward.1} parent=11 // pred_check
          %p420 = pneg %p44
        $region14: #{decoder_forward.1} parent=11 // pred_check_branch
          %422 = sbr.rel (%p420) target = $region16
        $region15: #{decoder_forward.1} parent=11 // pred_region
          _
        $region16: #{decoder_forward.1} parent=11 // pred_fallthru
          _
        // Predicated region
        $region17: #{decoder_forward.1} parent=11 // pred_check
          %p423 = pneg %p65
        $region18: #{decoder_forward.1} parent=11 // pred_check_branch
          %425 = sbr.rel (%p423) target = $region20
        $region19: #{decoder_forward.1} parent=11 // pred_region
          _
        $region20: #{decoder_forward.1} parent=11 // pred_fallthru
          _
        // Predicated region
        $region21: #{decoder_forward.1} parent=11 // pred_check
          %p426 = pneg %p86
        $region22: #{decoder_forward.1} parent=11 // pred_check_branch
          %428 = sbr.rel (%p426) target = $region24
        $region23: #{decoder_forward.1} parent=11 // pred_region
          _
        $region24: #{decoder_forward.1} parent=11 // pred_fallthru
          _
        // Predicated region
        $region25: #{decoder_forward.1} parent=11 // pred_check
          %p429 = pneg %p107
        $region26: #{decoder_forward.1} parent=11 // pred_check_branch
          %431 = sbr.rel (%p429) target = $region28
        $region27: #{decoder_forward.1} parent=11 // pred_region
          _
        $region28: #{decoder_forward.1} parent=11 // pred_fallthru
          _
        // Predicated region
        $region29: #{decoder_forward.1} parent=11 // pred_check
          %p432 = pneg %p128
        $region30: #{decoder_forward.1} parent=11 // pred_check_branch
          %434 = sbr.rel (%p432) target = $region32
        $region31: #{decoder_forward.1} parent=11 // pred_region
          _
        $region32: #{decoder_forward.1} parent=11 // pred_fallthru
          _
        // Predicated region
        $region33: #{decoder_forward.1} parent=11 // pred_check
          %p435 = pneg %p149
        $region34: #{decoder_forward.1} parent=11 // pred_check_branch
          %437 = sbr.rel (%p435) target = $region36
        $region35: #{decoder_forward.1} parent=11 // pred_region
          _
        $region36: #{decoder_forward.1} parent=11 // pred_fallthru
          _
        // Predicated region
        $region37: #{decoder_forward.1} parent=11 // pred_check
          %p438 = pneg %p170
        $region38: #{decoder_forward.1} parent=11 // pred_check_branch
          %440 = sbr.rel (%p438) target = $region40
        $region39: #{decoder_forward.1} parent=11 // pred_region
          _
        $region40: #{decoder_forward.1} parent=11 // pred_fallthru
          _
        // Predicated region
        $region41: #{decoder_forward.1} parent=11 // pred_check
          %p441 = pneg %p191
        $region42: #{decoder_forward.1} parent=11 // pred_check_branch
          %443 = sbr.rel (%p441) target = $region44
        $region43: #{decoder_forward.1} parent=11 // pred_region
          _
        $region44: #{decoder_forward.1} parent=11 // pred_fallthru
          _
        // Predicated region
        $region45: #{decoder_forward.1} parent=11 // pred_check
          %p444 = pneg %p212
        $region46: #{decoder_forward.1} parent=11 // pred_check_branch
          %446 = sbr.rel (%p444) target = $region48
        $region47: #{decoder_forward.1} parent=11 // pred_region
          _
        $region48: #{decoder_forward.1} parent=11 // pred_fallthru
          _
        // Predicated region
        $region49: #{decoder_forward.1} parent=11 // pred_check
          %p447 = pneg %p363
        $region50: #{decoder_forward.1} parent=11 // pred_check_branch
          %449 = sbr.rel (%p447) target = $region52
        $region51: #{decoder_forward.1} parent=11 // pred_region
          _
        $region52: #{decoder_forward.1} parent=11 // pred_fallthru
          _
        // Predicated region
        $region53: #{decoder_forward.1} parent=11 // pred_check
          %p450 = pneg %p384
        $region54: #{decoder_forward.1} parent=11 // pred_check_branch
          %452 = sbr.rel (%p450) target = $region56
        $region55: #{decoder_forward.1} parent=11 // pred_region
          _
        $region56: #{decoder_forward.1} parent=11 // pred_fallthru
          _
      $region12: #{decoder_forward.1} parent=5 // pred_fallthru
        _
      %p453 = scmp.lt.s32.totalorder %s23, 2
      // Predicated region
      $region57: #{decoder_forward.1} parent=5 // pred_check
        %p454 = pneg %p453
      $region58: #{decoder_forward.1} parent=5 // pred_check_branch
        %456 = sbr.rel (%p454) target = $region60
      $region59: #{decoder_forward.1} parent=5 // pred_region
        // Predicated region
        $region61: #{decoder_forward.1} parent=59 // pred_check
          %p457 = pneg %p232
        $region62: #{decoder_forward.1} parent=59 // pred_check_branch
          %459 = sbr.rel (%p457) target = $region64
        $region63: #{decoder_forward.1} parent=59 // pred_region
          %p460 = scmp.lt.s32.totalorder %s23, 1
          %s461 = scalar_select %p460, %s23, 1
          %s462 = smul.addr %s461, 32
          %s463 = smul.addr %s462, 8
          %s464 = scalar_lea.vmem %s9, %s463
        $region64: #{decoder_forward.1} parent=59 // pred_fallthru
          _
        // Predicated region
        $region65: #{decoder_forward.1} parent=59 // pred_check
          %p465 = pneg %p258
        $region66: #{decoder_forward.1} parent=59 // pred_check_branch
          %467 = sbr.rel (%p465) target = $region68
        $region67: #{decoder_forward.1} parent=59 // pred_region
          %p468 = scmp.lt.s32.totalorder %s23, 1
          %s469 = scalar_select %p468, %s23, 1
          %s470 = smul.addr %s469, 2
          %s471 = smul.addr %s470, 8
          %s472 = scalar_lea.vmem %s10, %s471
        $region68: #{decoder_forward.1} parent=59 // pred_fallthru
          _
        // Predicated region
        $region69: #{decoder_forward.1} parent=59 // pred_check
          %p473 = pneg %p284
        $region70: #{decoder_forward.1} parent=59 // pred_check_branch
          %475 = sbr.rel (%p473) target = $region72
        $region71: #{decoder_forward.1} parent=59 // pred_region
          %p476 = scmp.lt.s32.totalorder %s23, 1
          %s477 = scalar_select %p476, %s23, 1
          %s478 = smul.addr %s477, 4
          %s479 = smul.addr %s478, 8
          %s480 = scalar_lea.vmem %s11, %s479
        $region72: #{decoder_forward.1} parent=59 // pred_fallthru
          _
        // Predicated region
        $region73: #{decoder_forward.1} parent=59 // pred_check
          %p481 = pneg %p310
        $region74: #{decoder_forward.1} parent=59 // pred_check_branch
          %483 = sbr.rel (%p481) target = $region76
        $region75: #{decoder_forward.1} parent=59 // pred_region
          %p484 = scmp.lt.s32.totalorder %s23, 1
          %s485 = scalar_select %p484, %s23, 1
          %s486 = scalar_lea.vmem %s12, %s485
        $region76: #{decoder_forward.1} parent=59 // pred_fallthru
          _
        // Predicated region
        $region77: #{decoder_forward.1} parent=59 // pred_check
          %p487 = pneg %p336
        $region78: #{decoder_forward.1} parent=59 // pred_check_branch
          %489 = sbr.rel (%p487) target = $region80
        $region79: #{decoder_forward.1} parent=59 // pred_region
          %p490 = scmp.lt.s32.totalorder %s23, 1
          %s491 = scalar_select %p490, %s23, 1
          %s492 = smul.addr %s491, 16
          %s493 = smul.addr %s492, 8
          %s494 = scalar_lea.vmem %s13, %s493
        $region80: #{decoder_forward.1} parent=59 // pred_fallthru
          _
      $region60: #{decoder_forward.1} parent=5 // pred_fallthru
        _
      %p495 = scmp.le.s32.totalorder 1, %s23
      %p496 = scmp.lt.s32.totalorder %s23, 3
      %p497 = pnand %p495, %p496
      %p498 = pneg %p497
      // Predicated region
      $region81: #{decoder_forward.1} parent=5 // pred_check
        _
      $region82: #{decoder_forward.1} parent=5 // pred_check_branch
        %500 = sbr.rel (%p497) target = $region84
      $region83: #{decoder_forward.1} parent=5 // pred_region
        %s501 = ssub.s32 %s23, 1
        %p502 = pneg %p44
        %p503 = pneg %p41
        %p504 = pneg %p65
        %p505 = pneg %p62
        %p506 = pneg %p86
        %p507 = pneg %p83
        %p508 = pneg %p107
        %p509 = pneg %p104
        %p510 = pneg %p128
        %p511 = pneg %p125
        %p512 = pneg %p149
        %p513 = pneg %p146
        %p514 = pneg %p170
        %p515 = pneg %p167
        %p516 = pneg %p191
        %p517 = pneg %p188
        %p518 = pneg %p212
        %p519 = pneg %p209
        %p520 = scmp.lt.s32.totalorder %s28, 1
        %s521 = scalar_select %p520, %s28, 1
        %s522 = smul.addr %s521, 32
        %s523 = smul.addr %s522, 8
        %s524 = scalar_lea.vmem %s9, %s523
        %p525 = pneg %p238
        %p526 = pneg %p235
        %p527 = scmp.lt.s32.totalorder %s28, 1
        %s528 = scalar_select %p527, %s28, 1
        %s529 = smul.addr %s528, 2
        %s530 = smul.addr %s529, 8
        %s531 = scalar_lea.vmem %s10, %s530
        %p532 = pneg %p264
        %p533 = pneg %p261
        %p534 = scmp.lt.s32.totalorder %s28, 1
        %s535 = scalar_select %p534, %s28, 1
        %s536 = smul.addr %s535, 4
        %s537 = smul.addr %s536, 8
        %s538 = scalar_lea.vmem %s11, %s537
        %p539 = pneg %p290
        %p540 = pneg %p287
        %p541 = scmp.lt.s32.totalorder %s28, 1
        %s542 = scalar_select %p541, %s28, 1
        %s543 = scalar_lea.vmem %s12, %s542
        %p544 = pneg %p316
        %p545 = pneg %p313
        %p546 = scmp.lt.s32.totalorder %s28, 1
        %s547 = scalar_select %p546, %s28, 1
        %s548 = smul.addr %s547, 16
        %s549 = smul.addr %s548, 8
        %s550 = scalar_lea.vmem %s13, %s549
        %p551 = pneg %p342
        %p552 = pneg %p339
        %p553 = pneg %p363
        %p554 = pneg %p360
        %p555 = pneg %p384
        %p556 = pneg %p381
        %p557 = pneg %p405
        %p558 = pneg %p402
        %p559 = scmp.lt.s32.totalorder %s28, 1
        %s560 = scalar_select %p559, %s28, 1
        %s561 = smul.addr %s560, 32
        %s562 = smul.addr %s561, 8
        %s563 = scalar_lea.vmem %s9, %s562
        %p564 = scmp.lt.s32.totalorder %s28, 1
        %s565 = scalar_select %p564, %s28, 1
        %s566 = smul.addr %s565, 2
        %s567 = smul.addr %s566, 8
        %s568 = scalar_lea.vmem %s10, %s567
        %p569 = scmp.lt.s32.totalorder %s28, 1
        %s570 = scalar_select %p569, %s28, 1
        %s571 = smul.addr %s570, 4
        %s572 = smul.addr %s571, 8
        %s573 = scalar_lea.vmem %s11, %s572
        %p574 = scmp.lt.s32.totalorder %s28, 1
        %s575 = scalar_select %p574, %s28, 1
        %s576 = scalar_lea.vmem %s12, %s575
        %p577 = scmp.lt.s32.totalorder %s28, 1
        %s578 = scalar_select %p577, %s28, 1
        %s579 = smul.addr %s578, 16
        %s580 = smul.addr %s579, 8
        %s581 = scalar_lea.vmem %s13, %s580
        %p582 = scmp.eq.s32.totalorder %s28, 0
        // Predicated region
        $region85: #{decoder_forward.1} parent=83 // pred_check
          %p583 = pneg %p582
        $region86: #{decoder_forward.1} parent=83 // pred_check_branch
          %585 = sbr.rel (%p583) target = $region88
        $region87: #{decoder_forward.1} parent=83 // pred_region
          %v586 = vld [vmem:[%s0] sm:$0xff]
          %v587 = vld [vmem:[%s0 + $0x8] sm:$0xff]
          %v588 = vld [vmem:[%s1] sm:$0xff]
          %v589 = vld [vmem:[%s1 + $0x8] sm:$0xff]
          %v590 = vld [vmem:[%s1 + $0x10] sm:$0xff]
          %v591 = vld [vmem:[%s1 + $0x18] sm:$0xff]
          %v592 = vld [vmem:[%s1 + $0x20] sm:$0xff]
          %v593 = vld [vmem:[%s1 + $0x28] sm:$0xff]
          %v594 = vld [vmem:[%s1 + $0x30] sm:$0xff]
          %v595 = vld [vmem:[%s1 + $0x38] sm:$0xff]
          %v596 = vld [vmem:[%s1 + $0x40] sm:$0xff]
          %v597 = vld [vmem:[%s1 + $0x48] sm:$0xff]
          %v598 = vld [vmem:[%s1 + $0x50] sm:$0xff]
          %v599 = vld [vmem:[%s1 + $0x58] sm:$0xff]
          %v600 = vld [vmem:[%s1 + $0x60] sm:$0xff]
          %v601 = vld [vmem:[%s1 + $0x68] sm:$0xff]
          %v602 = vld [vmem:[%s1 + $0x70] sm:$0xff]
          %v603 = vld [vmem:[%s1 + $0x78] sm:$0xff]
          %v604 = vld [vmem:[%s2] sm:$0xff]
          %v605 = vld [vmem:[%s2 + $0x8] sm:$0xff]
          %606 = vmatpush.msra.mxu0 %v603
          %607 = vmatpush.msra.mxu0 %v602
          %608 = vmatpush.msra.mxu0 %v601
          %609 = vmatpush.msra.mxu0 %v600
          %610 = vmatpush.msra.mxu0 %v599
          %611 = vmatpush.msra.mxu0 %v598
          %612 = vmatpush.msra.mxu0 %v597
          %613 = vmatpush.msra.mxu0 %v596
          %614 = vmatpush.msra.mxu0 %v595
          %615 = vmatpush.msra.mxu0 %v594
          %616 = vmatpush.msra.mxu0 %v593
          %617 = vmatpush.msra.mxu0 %v592
          %618 = vmatpush.msra.mxu0 %v591
          %619 = vmatpush.msra.mxu0 %v590
          %620 = vmatpush.msra.mxu0 %v589
          %621 = vmatpush.msra.mxu0 %v588
          %622 = vmatmul.f32.gmra.mxu0 %v586
          %v623 = vpop.f32.mrf.mxu0
          %v624 = vadd.f32 %v604, %v623
          %625 = vmatmul.f32.gmra.mxu0 %v587
          %v626 = vpop.f32.mrf.mxu0
          %v627 = vadd.f32 %v605, %v626
          %628 = vdwg.mxu0
          %vm629 = vcmask 261120
          %630 = vst.msk [vmem:[#allocation2] sm:$0xff] %vm629, %v624
          %631 = vst.msk [vmem:[#allocation2 + $0x8] sm:$0xff] %vm629, %v627
        $region88: #{decoder_forward.1} parent=83 // pred_fallthru
          _
        %v632 = vld [vmem:[#allocation2] sm:$0xff]
        %v633 = vld [vmem:[#allocation2 + $0x8] sm:$0xff]
        %v634 = vld [vmem:[%s3] sm:$0xff]
        %v635 = vld [vmem:[%s3 + $0x8] sm:$0xff]
        %v636 = vld [vmem:[%s4] sm:$0xff]
        %v637 = vld [vmem:[%s4 + $0x8] sm:$0xff]
        %v638 = vld [vmem:[%s4 + $0x10] sm:$0xff]
        %v639 = vld [vmem:[%s4 + $0x18] sm:$0xff]
        %v640 = vld [vmem:[%s4 + $0x20] sm:$0xff]
        %v641 = vld [vmem:[%s4 + $0x28] sm:$0xff]
        %v642 = vld [vmem:[%s4 + $0x30] sm:$0xff]
        %v643 = vld [vmem:[%s4 + $0x38] sm:$0xff]
        %v644 = vld [vmem:[%s5] sm:$0xff]
        %v645 = vld [vmem:[%s5 + $0x8] sm:$0xff]
        %v646 = vld [vmem:[%s6] sm:$0xff]
        %v647 = vld [vmem:[%s6 + $0x8] sm:$0xff]
        %v648 = vld [vmem:[%s6 + $0x10] sm:$0xff]
        %v649 = vld [vmem:[%s6 + $0x18] sm:$0xff]
        %v650 = vld [vmem:[%s6 + $0x20] sm:$0xff]
        %v651 = vld [vmem:[%s6 + $0x28] sm:$0xff]
        %v652 = vld [vmem:[%s6 + $0x30] sm:$0xff]
        %v653 = vld [vmem:[%s6 + $0x38] sm:$0xff]
        %v654 = vld [vmem:[%s7] sm:$0xff]
        %v655 = vld [vmem:[%s7 + $0x8] sm:$0xff]
        %v656 = vld [vmem:[%s7 + $0x10] sm:$0xff]
        %v657 = vld [vmem:[%s7 + $0x18] sm:$0xff]
        %v658 = vld [vmem:[%s7 + $0x20] sm:$0xff]
        %v659 = vld [vmem:[%s7 + $0x28] sm:$0xff]
        %v660 = vld [vmem:[%s7 + $0x30] sm:$0xff]
        %v661 = vld [vmem:[%s7 + $0x38] sm:$0xff]
        %v662 = vld [vmem:[%s563] sm:$0xff]
        %v663 = vld [vmem:[%s563 + $0x8] sm:$0xff]
        %v664 = vld [vmem:[%s563 + $0x10] sm:$0xff]
        %v665 = vld [vmem:[%s563 + $0x18] sm:$0xff]
        %v666 = vld [vmem:[%s563 + $0x20] sm:$0xff]
        %v667 = vld [vmem:[%s563 + $0x28] sm:$0xff]
        %v668 = vld [vmem:[%s563 + $0x30] sm:$0xff]
        %v669 = vld [vmem:[%s563 + $0x38] sm:$0xff]
        %v670 = vld [vmem:[%s563 + $0x40] sm:$0xff]
        %v671 = vld [vmem:[%s563 + $0x48] sm:$0xff]
        %v672 = vld [vmem:[%s563 + $0x50] sm:$0xff]
        %v673 = vld [vmem:[%s563 + $0x58] sm:$0xff]
        %v674 = vld [vmem:[%s563 + $0x60] sm:$0xff]
        %v675 = vld [vmem:[%s563 + $0x68] sm:$0xff]
        %v676 = vld [vmem:[%s563 + $0x70] sm:$0xff]
        %v677 = vld [vmem:[%s563 + $0x78] sm:$0xff]
        %v678 = vld [vmem:[%s568] sm:$0x1]
        %vm679 = vcmask 261120
        %v681 = vsel %vm679, %v632, 0
        %v684 = vsel %vm679, %v633, 0
        %686 = vmatpush.msra.mxu0 0.0
        %687 = vmatpush.msra.mxu0 0.0
        %688 = vmatpush.msra.mxu0 0.0
        %689 = vmatpush.msra.mxu0 0.0
        %690 = vmatpush.msra.mxu0 0.0
        %691 = vmatpush.msra.mxu0 0.0
        %692 = vmatpush.msra.mxu0 0.0
        %693 = vmatpush.msra.mxu0 0.0
        %694 = vmatpush.msra.mxu0 0.0
        %695 = vmatpush.msra.mxu0 0.0
        %696 = vmatpush.msra.mxu0 0.0
        %697 = vmatpush.msra.mxu0 0.0
        %698 = vmatpush.msra.mxu0 %v665
        %699 = vmatpush.msra.mxu0 %v664
        %700 = vmatpush.msra.mxu0 %v663
        %701 = vmatpush.msra.mxu0 %v662
        %702 = vmatmul.f32.gmra.mxu0 %v681
        %v703 = vpop.f32.mrf.mxu0
        %v704 = vadd.f32 0.0, %v703
        %705 = vmatmul.f32.gmra.mxu0 %v684
        %v706 = vpop.f32.mrf.mxu0
        %v707 = vadd.f32 0.0, %v706
        %708 = vdwg.mxu0
        %709 = vmatpush.msra.mxu0 0.0
        %710 = vmatpush.msra.mxu0 0.0
        %711 = vmatpush.msra.mxu0 0.0
        %712 = vmatpush.msra.mxu0 0.0
        %713 = vmatpush.msra.mxu0 0.0
        %714 = vmatpush.msra.mxu0 0.0
        %715 = vmatpush.msra.mxu0 0.0
        %716 = vmatpush.msra.mxu0 0.0
        %717 = vmatpush.msra.mxu0 0.0
        %718 = vmatpush.msra.mxu0 0.0
        %719 = vmatpush.msra.mxu0 0.0
        %720 = vmatpush.msra.mxu0 0.0
        %721 = vmatpush.msra.mxu0 %v669
        %722 = vmatpush.msra.mxu0 %v668
        %723 = vmatpush.msra.mxu0 %v667
        %724 = vmatpush.msra.mxu0 %v666
        %725 = vmatmul.f32.gmra.mxu0 %v681
        %v726 = vpop.f32.mrf.mxu0
        %v727 = vadd.f32 0.0, %v726
        %728 = vmatmul.f32.gmra.mxu0 %v684
        %v729 = vpop.f32.mrf.mxu0
        %v730 = vadd.f32 0.0, %v729
        %731 = vdwg.mxu0
        %732 = vmatpush.msra.mxu0 0.0
        %733 = vmatpush.msra.mxu0 0.0
        %734 = vmatpush.msra.mxu0 0.0
        %735 = vmatpush.msra.mxu0 0.0
        %736 = vmatpush.msra.mxu0 0.0
        %737 = vmatpush.msra.mxu0 0.0
        %738 = vmatpush.msra.mxu0 0.0
        %739 = vmatpush.msra.mxu0 0.0
        %740 = vmatpush.msra.mxu0 0.0
        %741 = vmatpush.msra.mxu0 0.0
        %742 = vmatpush.msra.mxu0 0.0
        %743 = vmatpush.msra.mxu0 0.0
        %744 = vmatpush.msra.mxu0 %v673
        %745 = vmatpush.msra.mxu0 %v672
        %746 = vmatpush.msra.mxu0 %v671
        %747 = vmatpush.msra.mxu0 %v670
        %748 = vmatmul.f32.gmra.mxu0 %v681
        %v749 = vpop.f32.mrf.mxu0
        %v750 = vadd.f32 0.0, %v749
        %751 = vmatmul.f32.gmra.mxu0 %v684
        %v752 = vpop.f32.mrf.mxu0
        %v753 = vadd.f32 0.0, %v752
        %754 = vdwg.mxu0
        %vm755 = vcmask 130048
        %v757 = vsel %vm755, %v636, 0
        %v760 = vsel %vm755, %v637, 0
        %v763 = vsel %vm755, %v638, 0
        %v766 = vsel %vm755, %v639, 0
        %v769 = vsel %vm755, %v640, 0
        %v772 = vsel %vm755, %v641, 0
        %v775 = vsel %vm755, %v642, 0
        %v778 = vsel %vm755, %v643, 0
        %780 = vmatpush.msra.mxu0 0.0
        %781 = vmatpush.msra.mxu0 0.0
        %782 = vmatpush.msra.mxu0 0.0
        %783 = vmatpush.msra.mxu0 0.0
        %784 = vmatpush.msra.mxu0 0.0
        %785 = vmatpush.msra.mxu0 0.0
        %786 = vmatpush.msra.mxu0 0.0
        %787 = vmatpush.msra.mxu0 0.0
        %788 = vmatpush.msra.mxu0 0.0
        %789 = vmatpush.msra.mxu0 0.0
        %790 = vmatpush.msra.mxu0 0.0
        %791 = vmatpush.msra.mxu0 0.0
        %792 = vmatpush.msra.mxu0 0.0
        %793 = vmatpush.msra.mxu0 0.0
        %794 = vmatpush.msra.mxu0 %v753
        %795 = vmatpush.msra.mxu0 %v750
        %796 = vmatmul.f32.gmra.mxu0 %v757
        %v797 = vpop.f32.mrf.mxu0
        %v798 = vadd.f32 0.0, %v797
        %799 = vmatmul.f32.gmra.mxu0 %v760
        %v800 = vpop.f32.mrf.mxu0
        %v801 = vadd.f32 0.0, %v800
        %802 = vmatmul.f32.gmra.mxu0 %v763
        %v803 = vpop.f32.mrf.mxu0
        %v804 = vadd.f32 0.0, %v803
        %805 = vmatmul.f32.gmra.mxu0 %v766
        %v806 = vpop.f32.mrf.mxu0
        %v807 = vadd.f32 0.0, %v806
        %808 = vmatmul.f32.gmra.mxu0 %v769
        %v809 = vpop.f32.mrf.mxu0
        %v810 = vadd.f32 0.0, %v809
        %811 = vmatmul.f32.gmra.mxu0 %v772
        %v812 = vpop.f32.mrf.mxu0
        %v813 = vadd.f32 0.0, %v812
        %814 = vmatmul.f32.gmra.mxu0 %v775
        %v815 = vpop.f32.mrf.mxu0
        %v816 = vadd.f32 0.0, %v815
        %817 = vmatmul.f32.gmra.mxu0 %v778
        %v818 = vpop.f32.mrf.mxu0
        %v819 = vadd.f32 0.0, %v818
        %820 = vdwg.mxu0
        %v821 = vmul.f32 %v798, %v646
        %v822 = vmul.f32 %v801, %v647
        %v823 = vmul.f32 %v804, %v648
        %v824 = vmul.f32 %v807, %v649
        %v825 = vmul.f32 %v810, %v650
        %v826 = vmul.f32 %v813, %v651
        %v827 = vmul.f32 %v816, %v652
        %v828 = vmul.f32 %v819, %v653
        %v830 = vsel %vm679, %v821, 0
        %v833 = vsel %vm679, %v822, 0
        %v836 = vsel %vm679, %v823, 0
        %v839 = vsel %vm679, %v824, 0
        %v842 = vsel %vm679, %v825, 0
        %v845 = vsel %vm679, %v826, 0
        %v848 = vsel %vm679, %v827, 0
        %v851 = vsel %vm679, %v828, 0
        %v854 = vsel %vm679, %v727, 0
        %v857 = vsel %vm679, %v730, 0
        %859 = vmatpush.xpose.msra.mxu0 0.0
        %860 = vmatpush.xpose.msra.mxu0 0.0
        %861 = vmatpush.xpose.msra.mxu0 0.0
        %862 = vmatpush.xpose.msra.mxu0 0.0
        %863 = vmatpush.xpose.msra.mxu0 0.0
        %864 = vmatpush.xpose.msra.mxu0 0.0
        %865 = vmatpush.xpose.msra.mxu0 0.0
        %866 = vmatpush.xpose.msra.mxu0 0.0
        %867 = vmatpush.xpose.msra.mxu0 0.0
        %868 = vmatpush.xpose.msra.mxu0 0.0
        %869 = vmatpush.xpose.msra.mxu0 0.0
        %870 = vmatpush.xpose.msra.mxu0 0.0
        %871 = vmatpush.xpose.msra.mxu0 0.0
        %872 = vmatpush.xpose.msra.mxu0 0.0
        %873 = vmatpush.xpose.msra.mxu0 %v857
        %874 = vmatpush.xpose.msra.mxu0 %v854
        %875 = vmatmul.f32.gmra.mxu0 %v830
        %v876 = vpop.f32.mrf.mxu0
        %v877 = vadd.f32 %v654, %v876
        %878 = vmatmul.f32.gmra.mxu0 %v833
        %v879 = vpop.f32.mrf.mxu0
        %v880 = vadd.f32 %v655, %v879
        %881 = vmatmul.f32.gmra.mxu0 %v836
        %v882 = vpop.f32.mrf.mxu0
        %v883 = vadd.f32 %v656, %v882
        %884 = vmatmul.f32.gmra.mxu0 %v839
        %v885 = vpop.f32.mrf.mxu0
        %v886 = vadd.f32 %v657, %v885
        %887 = vmatmul.f32.gmra.mxu0 %v842
        %v888 = vpop.f32.mrf.mxu0
        %v889 = vadd.f32 %v658, %v888
        %890 = vmatmul.f32.gmra.mxu0 %v845
        %v891 = vpop.f32.mrf.mxu0
        %v892 = vadd.f32 %v659, %v891
        %893 = vmatmul.f32.gmra.mxu0 %v848
        %v894 = vpop.f32.mrf.mxu0
        %v895 = vadd.f32 %v660, %v894
        %896 = vmatmul.f32.gmra.mxu0 %v851
        %v897 = vpop.f32.mrf.mxu0
        %v898 = vadd.f32 %v661, %v897
        %899 = vdwg.mxu0
        %v900 = vsel %vm755, %v877, -inf
        %901 = vmax.xlane.f32.xlu0 %v900
        %v902 = vpop.xlane.xlu0 %901
        %v903 = vsel %vm755, %v880, -inf
        %904 = vmax.xlane.f32.xlu0 %v903
        %v905 = vpop.xlane.xlu0 %904
        %v906 = vsel %vm755, %v883, -inf
        %907 = vmax.xlane.f32.xlu0 %v906
        %v908 = vpop.xlane.xlu0 %907
        %v909 = vsel %vm755, %v886, -inf
        %910 = vmax.xlane.f32.xlu0 %v909
        %v911 = vpop.xlane.xlu0 %910
        %v912 = vsel %vm755, %v889, -inf
        %913 = vmax.xlane.f32.xlu0 %v912
        %v914 = vpop.xlane.xlu0 %913
        %v915 = vsel %vm755, %v892, -inf
        %916 = vmax.xlane.f32.xlu0 %v915
        %v917 = vpop.xlane.xlu0 %916
        %v918 = vsel %vm755, %v895, -inf
        %919 = vmax.xlane.f32.xlu0 %v918
        %v920 = vpop.xlane.xlu0 %919
        %v921 = vsel %vm755, %v898, -inf
        %922 = vmax.xlane.f32.xlu0 %v921
        %v923 = vpop.xlane.xlu0 %922
        %v924 = vsub.f32 %v877, %v902
        %v925 = vsub.f32 %v880, %v905
        %v926 = vsub.f32 %v883, %v908
        %v927 = vsub.f32 %v886, %v911
        %v928 = vsub.f32 %v889, %v914
        %v929 = vsub.f32 %v892, %v917
        %v930 = vsub.f32 %v895, %v920
        %v931 = vsub.f32 %v898, %v923
        %v932 = vmul.f32 %v924, 1.442695
        %v933 = vpow.pop %v932
        %v934 = vmul.f32 %v925, 1.442695
        %v935 = vpow.pop %v934
        %v936 = vmul.f32 %v926, 1.442695
        %v937 = vpow.pop %v936
        %v938 = vmul.f32 %v927, 1.442695
        %v939 = vpow.pop %v938
        %v940 = vmul.f32 %v928, 1.442695
        %v941 = vpow.pop %v940
        %v942 = vmul.f32 %v929, 1.442695
        %v943 = vpow.pop %v942
        %v944 = vmul.f32 %v930, 1.442695
        %v945 = vpow.pop %v944
        %v946 = vmul.f32 %v931, 1.442695
        %v947 = vpow.pop %v946
        %v948 = vsel %vm755, %v933, 0.0
        %949 = vadd.xlane.f32.xlu0 %v948
        %v950 = vpop.xlane.xlu0 %949
        %v951 = vsel %vm755, %v935, 0.0
        %952 = vadd.xlane.f32.xlu0 %v951
        %v953 = vpop.xlane.xlu0 %952
        %v954 = vsel %vm755, %v937, 0.0
        %955 = vadd.xlane.f32.xlu0 %v954
        %v956 = vpop.xlane.xlu0 %955
        %v957 = vsel %vm755, %v939, 0.0
        %958 = vadd.xlane.f32.xlu0 %v957
        %v959 = vpop.xlane.xlu0 %958
        %v960 = vsel %vm755, %v941, 0.0
        %961 = vadd.xlane.f32.xlu0 %v960
        %v962 = vpop.xlane.xlu0 %961
        %v963 = vsel %vm755, %v943, 0.0
        %964 = vadd.xlane.f32.xlu0 %v963
        %v965 = vpop.xlane.xlu0 %964
        %v966 = vsel %vm755, %v945, 0.0
        %967 = vadd.xlane.f32.xlu0 %v966
        %v968 = vpop.xlane.xlu0 %967
        %v969 = vsel %vm755, %v947, 0.0
        %970 = vadd.xlane.f32.xlu0 %v969
        %v971 = vpop.xlane.xlu0 %970
        %v972 = vrcp.pop %v950
        %v973 = vrcp.pop %v953
        %v974 = vrcp.pop %v956
        %v975 = vrcp.pop %v959
        %v976 = vrcp.pop %v962
        %v977 = vrcp.pop %v965
        %v978 = vrcp.pop %v968
        %v979 = vrcp.pop %v971
        %v980 = vmul.f32 %v950, %v972
        %v981 = vmul.f32 %v953, %v973
        %v982 = vmul.f32 %v956, %v974
        %v983 = vmul.f32 %v959, %v975
        %v984 = vmul.f32 %v962, %v976
        %v985 = vmul.f32 %v965, %v977
        %v986 = vmul.f32 %v968, %v978
        %v987 = vmul.f32 %v971, %v979
        %v988 = vsub.f32 2.0, %v980
        %v989 = vsub.f32 2.0, %v981
        %v990 = vsub.f32 2.0, %v982
        %v991 = vsub.f32 2.0, %v983
        %v992 = vsub.f32 2.0, %v984
        %v993 = vsub.f32 2.0, %v985
        %v994 = vsub.f32 2.0, %v986
        %v995 = vsub.f32 2.0, %v987
        %v996 = vmul.f32 %v972, %v988
        %v997 = vmul.f32 %v973, %v989
        %v998 = vmul.f32 %v974, %v990
        %v999 = vmul.f32 %v975, %v991
        %v1000 = vmul.f32 %v976, %v992
        %v1001 = vmul.f32 %v977, %v993
        %v1002 = vmul.f32 %v978, %v994
        %v1003 = vmul.f32 %v979, %v995
        %v1004 = vmul.f32 %v933, %v996
        %v1005 = vmul.f32 %v935, %v997
        %v1006 = vmul.f32 %v937, %v998
        %v1007 = vmul.f32 %v939, %v999
        %v1008 = vmul.f32 %v941, %v1000
        %v1009 = vmul.f32 %v943, %v1001
        %v1010 = vmul.f32 %v945, %v1002
        %v1011 = vmul.f32 %v947, %v1003
        %v1013 = vsel %vm755, %v1004, 0
        %v1016 = vsel %vm755, %v1005, 0
        %v1019 = vsel %vm755, %v1006, 0
        %v1022 = vsel %vm755, %v1007, 0
        %v1025 = vsel %vm755, %v1008, 0
        %v1028 = vsel %vm755, %v1009, 0
        %v1031 = vsel %vm755, %v1010, 0
        %v1034 = vsel %vm755, %v1011, 0
        %1036 = vmatpush.msra.mxu0 0.0
        %1037 = vmatpush.msra.mxu0 0.0
        %1038 = vmatpush.msra.mxu0 0.0
        %1039 = vmatpush.msra.mxu0 0.0
        %1040 = vmatpush.msra.mxu0 0.0
        %1041 = vmatpush.msra.mxu0 0.0
        %1042 = vmatpush.msra.mxu0 0.0
        %1043 = vmatpush.msra.mxu0 0.0
        %1044 = vmatpush.msra.mxu0 0.0
        %1045 = vmatpush.msra.mxu0 0.0
        %1046 = vmatpush.msra.mxu0 0.0
        %1047 = vmatpush.msra.mxu0 0.0
        %1048 = vmatpush.msra.mxu0 0.0
        %1049 = vmatpush.msra.mxu0 0.0
        %1050 = vmatpush.msra.mxu0 %v707
        %1051 = vmatpush.msra.mxu0 %v704
        %1052 = vmatmul.f32.gmra.mxu0 %v1013
        %v1053 = vpop.f32.mrf.mxu0
        %v1054 = vadd.f32 0.0, %v1053
        %1055 = vmatmul.f32.gmra.mxu0 %v1016
        %v1056 = vpop.f32.mrf.mxu0
        %v1057 = vadd.f32 0.0, %v1056
        %1058 = vmatmul.f32.gmra.mxu0 %v1019
        %v1059 = vpop.f32.mrf.mxu0
        %v1060 = vadd.f32 0.0, %v1059
        %1061 = vmatmul.f32.gmra.mxu0 %v1022
        %v1062 = vpop.f32.mrf.mxu0
        %v1063 = vadd.f32 0.0, %v1062
        %1064 = vmatmul.f32.gmra.mxu0 %v1025
        %v1065 = vpop.f32.mrf.mxu0
        %v1066 = vadd.f32 0.0, %v1065
        %1067 = vmatmul.f32.gmra.mxu0 %v1028
        %v1068 = vpop.f32.mrf.mxu0
        %v1069 = vadd.f32 0.0, %v1068
        %1070 = vmatmul.f32.gmra.mxu0 %v1031
        %v1071 = vpop.f32.mrf.mxu0
        %v1072 = vadd.f32 0.0, %v1071
        %1073 = vmatmul.f32.gmra.mxu0 %v1034
        %v1074 = vpop.f32.mrf.mxu0
        %v1075 = vadd.f32 0.0, %v1074
        %1076 = vdwg.mxu0
        %v1077 = vmul.f32 %v1054, %v646
        %v1078 = vmul.f32 %v1057, %v647
        %v1079 = vmul.f32 %v1060, %v648
        %v1080 = vmul.f32 %v1063, %v649
        %v1081 = vmul.f32 %v1066, %v650
        %v1082 = vmul.f32 %v1069, %v651
        %v1083 = vmul.f32 %v1072, %v652
        %v1084 = vmul.f32 %v1075, %v653
        %vm1085 = vcmask 523264
        %v1087 = vsel %vm1085, %v644, 0
        %v1090 = vsel %vm1085, %v645, 0
        %1092 = vmatpush.msra.mxu0 0.0
        %1093 = vmatpush.msra.mxu0 0.0
        %1094 = vmatpush.msra.mxu0 0.0
        %1095 = vmatpush.msra.mxu0 0.0
        %1096 = vmatpush.msra.mxu0 0.0
        %1097 = vmatpush.msra.mxu0 0.0
        %1098 = vmatpush.msra.mxu0 0.0
        %1099 = vmatpush.msra.mxu0 0.0
        %1100 = vmatpush.msra.mxu0 %v1084
        %1101 = vmatpush.msra.mxu0 %v1083
        %1102 = vmatpush.msra.mxu0 %v1082
        %1103 = vmatpush.msra.mxu0 %v1081
        %1104 = vmatpush.msra.mxu0 %v1080
        %1105 = vmatpush.msra.mxu0 %v1079
        %1106 = vmatpush.msra.mxu0 %v1078
        %1107 = vmatpush.msra.mxu0 %v1077
        %1108 = vmatmul.f32.gmra.mxu0 %v1087
        %v1109 = vpop.f32.mrf.mxu0
        %v1110 = vadd.f32 0.0, %v1109
        %1111 = vmatmul.f32.gmra.mxu0 %v1090
        %v1112 = vpop.f32.mrf.mxu0
        %v1113 = vadd.f32 0.0, %v1112
        %1114 = vdwg.mxu0
        %v1115 = vperm.slane %v678, 0
        %v1117 = vsel %vm679, %v1110, 0
        %v1120 = vsel %vm679, %v1113, 0
        %1122 = vmatpush.msra.mxu0 0.0
        %1123 = vmatpush.msra.mxu0 0.0
        %1124 = vmatpush.msra.mxu0 0.0
        %1125 = vmatpush.msra.mxu0 0.0
        %1126 = vmatpush.msra.mxu0 0.0
        %1127 = vmatpush.msra.mxu0 0.0
        %1128 = vmatpush.msra.mxu0 0.0
        %1129 = vmatpush.msra.mxu0 0.0
        %1130 = vmatpush.msra.mxu0 0.0
        %1131 = vmatpush.msra.mxu0 0.0
        %1132 = vmatpush.msra.mxu0 0.0
        %1133 = vmatpush.msra.mxu0 0.0
        %1134 = vmatpush.msra.mxu0 %v677
        %1135 = vmatpush.msra.mxu0 %v676
        %1136 = vmatpush.msra.mxu0 %v675
        %1137 = vmatpush.msra.mxu0 %v674
        %1138 = vmatmul.f32.gmra.mxu0 %v1117
        %v1139 = vpop.f32.mrf.mxu0
        %v1140 = vadd.f32 %v1115, %v1139
        %1141 = vmatmul.f32.gmra.mxu0 %v1120
        %v1142 = vpop.f32.mrf.mxu0
        %v1143 = vadd.f32 %v1115, %v1142
        %1144 = vdwg.mxu0
        %v1145 = vadd.f32 %v1140, %v632
        %v1146 = vadd.f32 %v1143, %v633
        %v1147 = vld [vmem:[%s568 + $0x1] sm:$0x1]
        %v1148 = vld [vmem:[%s568 + $0x2] sm:$0x1]
        %v1149 = vsel %vm679, %v1145, 0.0
        %1150 = vadd.xlane.f32.xlu0 %v1149
        %v1151 = vpop.xlane.xlu0 %1150
        %v1152 = vsel %vm679, %v1146, 0.0
        %1153 = vadd.xlane.f32.xlu0 %v1152
        %v1154 = vpop.xlane.xlu0 %1153
        %v1155 = vrcp.pop 32.0
        %v1156 = vmul.f32 32.0, %v1155
        %v1157 = vsub.f32 1.0, %v1156
        %v1158 = vmul.f32 %v1155, %v1157
        %v1159 = vadd.f32 %v1155, %v1158
        %vm1160 = vweird.f32 %v1155
        %v1161 = vsel %vm1160, %v1155, %v1159
        %v1162 = vmul.f32 %v1151, %v1161
        %v1163 = vmul.f32 %v1154, %v1161
        %v1164 = vsub.f32 %v1145, %v1162
        %v1165 = vsub.f32 %v1146, %v1163
        %v1166 = vmul.f32 %v1164, %v1164
        %v1167 = vmul.f32 %v1165, %v1165
        %v1168 = vsel %vm679, %v1166, 0.0
        %1169 = vadd.xlane.f32.xlu0 %v1168
        %v1170 = vpop.xlane.xlu0 %1169
        %v1171 = vsel %vm679, %v1167, 0.0
        %1172 = vadd.xlane.f32.xlu0 %v1171
        %v1173 = vpop.xlane.xlu0 %1172
        %v1174 = vmul.f32 %v1170, %v1161
        %v1175 = vmul.f32 %v1173, %v1161
        %v1176 = vadd.f32 %v1174, 1e-05
        %v1177 = vadd.f32 %v1175, 1e-05
        %v1178 = vrsqrt.pop %v1176
        %v1179 = vmul.f32 %v1178, %v1176
        %v1180 = vmul.f32 %v1179, %v1178
        %v1181 = vmul.f32 0.5, %v1180
        %v1182 = vsub.f32 1.5, %v1181
        %v1183 = vmul.f32 %v1178, %v1182
        %vm1184 = vweird.f32 %v1176
        %vm1185 = vweird.f32 %v1178
        %vm1186 = vmor %vm1184, %vm1185
        %v1187 = vsel %vm1186, %v1178, %v1183
        %v1188 = vrsqrt.pop %v1177
        %v1189 = vmul.f32 %v1188, %v1177
        %v1190 = vmul.f32 %v1189, %v1188
        %v1191 = vmul.f32 0.5, %v1190
        %v1192 = vsub.f32 1.5, %v1191
        %v1193 = vmul.f32 %v1188, %v1192
        %vm1194 = vweird.f32 %v1177
        %vm1195 = vweird.f32 %v1188
        %vm1196 = vmor %vm1194, %vm1195
        %v1197 = vsel %vm1196, %v1188, %v1193
        %v1198 = vmul.f32 %v1164, %v1187
        %v1199 = vmul.f32 %v1165, %v1197
        %v1200 = vperm.slane %v1147, 0
        %v1201 = vmul.f32 %v1198, %v1200
        %v1202 = vmul.f32 %v1199, %v1200
        %v1203 = vperm.slane %v1148, 0
        %v1204 = vadd.f32 %v1201, %v1203
        %v1205 = vadd.f32 %v1202, %v1203
        %v1206 = vld [vmem:[%s8] sm:$0xff]
        %v1207 = vld [vmem:[%s8 + $0x8] sm:$0xff]
        %v1208 = vld [vmem:[%s8 + $0x10] sm:$0xff]
        %v1209 = vld [vmem:[%s8 + $0x18] sm:$0xff]
        %v1210 = vld [vmem:[%s8 + $0x20] sm:$0xff]
        %v1211 = vld [vmem:[%s8 + $0x28] sm:$0xff]
        %v1212 = vld [vmem:[%s8 + $0x30] sm:$0xff]
        %v1213 = vld [vmem:[%s8 + $0x38] sm:$0xff]
        %v1214 = vld [vmem:[%s563 + $0x80] sm:$0xff]
        %v1215 = vld [vmem:[%s563 + $0x88] sm:$0xff]
        %v1216 = vld [vmem:[%s563 + $0x90] sm:$0xff]
        %v1217 = vld [vmem:[%s563 + $0x98] sm:$0xff]
        %v1218 = vld [vmem:[%s563 + $0xa0] sm:$0xff]
        %v1219 = vld [vmem:[%s563 + $0xa8] sm:$0xff]
        %v1220 = vld [vmem:[%s563 + $0xb0] sm:$0xff]
        %v1221 = vld [vmem:[%s563 + $0xb8] sm:$0xff]
        %v1222 = vld [vmem:[%s563 + $0xc0] sm:$0xff]
        %v1223 = vld [vmem:[%s563 + $0xc8] sm:$0xff]
        %v1224 = vld [vmem:[%s563 + $0xd0] sm:$0xff]
        %v1225 = vld [vmem:[%s563 + $0xd8] sm:$0xff]
        %v1226 = vld [vmem:[%s563 + $0xe0] sm:$0xff]
        %v1227 = vld [vmem:[%s563 + $0xe8] sm:$0xff]
        %v1228 = vld [vmem:[%s563 + $0xf0] sm:$0xff]
        %v1229 = vld [vmem:[%s563 + $0xf8] sm:$0xff]
        %v1230 = vld [vmem:[%s568 + $0x3] sm:$0x1]
        %v1232 = vsel %vm679, %v634, 0
        %v1235 = vsel %vm679, %v635, 0
        %1237 = vmatpush.msra.mxu0 0.0
        %1238 = vmatpush.msra.mxu0 0.0
        %1239 = vmatpush.msra.mxu0 0.0
        %1240 = vmatpush.msra.mxu0 0.0
        %1241 = vmatpush.msra.mxu0 0.0
        %1242 = vmatpush.msra.mxu0 0.0
        %1243 = vmatpush.msra.mxu0 0.0
        %1244 = vmatpush.msra.mxu0 0.0
        %1245 = vmatpush.msra.mxu0 0.0
        %1246 = vmatpush.msra.mxu0 0.0
        %1247 = vmatpush.msra.mxu0 0.0
        %1248 = vmatpush.msra.mxu0 0.0
        %1249 = vmatpush.msra.mxu0 %v1217
        %1250 = vmatpush.msra.mxu0 %v1216
        %1251 = vmatpush.msra.mxu0 %v1215
        %1252 = vmatpush.msra.mxu0 %v1214
        %1253 = vmatmul.f32.gmra.mxu0 %v1232
        %v1254 = vpop.f32.mrf.mxu0
        %v1255 = vadd.f32 0.0, %v1254
        %1256 = vmatmul.f32.gmra.mxu0 %v1235
        %v1257 = vpop.f32.mrf.mxu0
        %v1258 = vadd.f32 0.0, %v1257
        %1259 = vdwg.mxu0
        %1260 = vmatpush.msra.mxu0 0.0
        %1261 = vmatpush.msra.mxu0 0.0
        %1262 = vmatpush.msra.mxu0 0.0
        %1263 = vmatpush.msra.mxu0 0.0
        %1264 = vmatpush.msra.mxu0 0.0
        %1265 = vmatpush.msra.mxu0 0.0
        %1266 = vmatpush.msra.mxu0 0.0
        %1267 = vmatpush.msra.mxu0 0.0
        %1268 = vmatpush.msra.mxu0 0.0
        %1269 = vmatpush.msra.mxu0 0.0
        %1270 = vmatpush.msra.mxu0 0.0
        %1271 = vmatpush.msra.mxu0 0.0
        %1272 = vmatpush.msra.mxu0 %v1221
        %1273 = vmatpush.msra.mxu0 %v1220
        %1274 = vmatpush.msra.mxu0 %v1219
        %1275 = vmatpush.msra.mxu0 %v1218
        %1276 = vmatmul.f32.gmra.mxu0 %v1232
        %v1277 = vpop.f32.mrf.mxu0
        %v1278 = vadd.f32 0.0, %v1277
        %1279 = vmatmul.f32.gmra.mxu0 %v1235
        %v1280 = vpop.f32.mrf.mxu0
        %v1281 = vadd.f32 0.0, %v1280
        %1282 = vdwg.mxu0
        %v1284 = vsel %vm679, %v1204, 0
        %v1287 = vsel %vm679, %v1205, 0
        %1289 = vmatpush.msra.mxu0 0.0
        %1290 = vmatpush.msra.mxu0 0.0
        %1291 = vmatpush.msra.mxu0 0.0
        %1292 = vmatpush.msra.mxu0 0.0
        %1293 = vmatpush.msra.mxu0 0.0
        %1294 = vmatpush.msra.mxu0 0.0
        %1295 = vmatpush.msra.mxu0 0.0
        %1296 = vmatpush.msra.mxu0 0.0
        %1297 = vmatpush.msra.mxu0 0.0
        %1298 = vmatpush.msra.mxu0 0.0
        %1299 = vmatpush.msra.mxu0 0.0
        %1300 = vmatpush.msra.mxu0 0.0
        %1301 = vmatpush.msra.mxu0 %v1225
        %1302 = vmatpush.msra.mxu0 %v1224
        %1303 = vmatpush.msra.mxu0 %v1223
        %1304 = vmatpush.msra.mxu0 %v1222
        %1305 = vmatmul.f32.gmra.mxu0 %v1284
        %v1306 = vpop.f32.mrf.mxu0
        %v1307 = vadd.f32 0.0, %v1306
        %1308 = vmatmul.f32.gmra.mxu0 %v1287
        %v1309 = vpop.f32.mrf.mxu0
        %v1310 = vadd.f32 0.0, %v1309
        %1311 = vdwg.mxu0
        %1312 = vmatpush.msra.mxu0 0.0
        %1313 = vmatpush.msra.mxu0 0.0
        %1314 = vmatpush.msra.mxu0 0.0
        %1315 = vmatpush.msra.mxu0 0.0
        %1316 = vmatpush.msra.mxu0 0.0
        %1317 = vmatpush.msra.mxu0 0.0
        %1318 = vmatpush.msra.mxu0 0.0
        %1319 = vmatpush.msra.mxu0 0.0
        %1320 = vmatpush.msra.mxu0 0.0
        %1321 = vmatpush.msra.mxu0 0.0
        %1322 = vmatpush.msra.mxu0 0.0
        %1323 = vmatpush.msra.mxu0 0.0
        %1324 = vmatpush.msra.mxu0 0.0
        %1325 = vmatpush.msra.mxu0 0.0
        %1326 = vmatpush.msra.mxu0 %v1310
        %1327 = vmatpush.msra.mxu0 %v1307
        %1328 = vmatmul.f32.gmra.mxu0 %v757
        %v1329 = vpop.f32.mrf.mxu0
        %v1330 = vadd.f32 0.0, %v1329
        %1331 = vmatmul.f32.gmra.mxu0 %v760
        %v1332 = vpop.f32.mrf.mxu0
        %v1333 = vadd.f32 0.0, %v1332
        %1334 = vmatmul.f32.gmra.mxu0 %v763
        %v1335 = vpop.f32.mrf.mxu0
        %v1336 = vadd.f32 0.0, %v1335
        %1337 = vmatmul.f32.gmra.mxu0 %v766
        %v1338 = vpop.f32.mrf.mxu0
        %v1339 = vadd.f32 0.0, %v1338
        %1340 = vmatmul.f32.gmra.mxu0 %v769
        %v1341 = vpop.f32.mrf.mxu0
        %v1342 = vadd.f32 0.0, %v1341
        %1343 = vmatmul.f32.gmra.mxu0 %v772
        %v1344 = vpop.f32.mrf.mxu0
        %v1345 = vadd.f32 0.0, %v1344
        %1346 = vmatmul.f32.gmra.mxu0 %v775
        %v1347 = vpop.f32.mrf.mxu0
        %v1348 = vadd.f32 0.0, %v1347
        %1349 = vmatmul.f32.gmra.mxu0 %v778
        %v1350 = vpop.f32.mrf.mxu0
        %v1351 = vadd.f32 0.0, %v1350
        %1352 = vdwg.mxu0
        %v1353 = vmul.f32 %v1330, %v646
        %v1354 = vmul.f32 %v1333, %v647
        %v1355 = vmul.f32 %v1336, %v648
        %v1356 = vmul.f32 %v1339, %v649
        %v1357 = vmul.f32 %v1342, %v650
        %v1358 = vmul.f32 %v1345, %v651
        %v1359 = vmul.f32 %v1348, %v652
        %v1360 = vmul.f32 %v1351, %v653
        %v1362 = vsel %vm679, %v1353, 0
        %v1365 = vsel %vm679, %v1354, 0
        %v1368 = vsel %vm679, %v1355, 0
        %v1371 = vsel %vm679, %v1356, 0
        %v1374 = vsel %vm679, %v1357, 0
        %v1377 = vsel %vm679, %v1358, 0
        %v1380 = vsel %vm679, %v1359, 0
        %v1383 = vsel %vm679, %v1360, 0
        %v1386 = vsel %vm679, %v1278, 0
        %v1389 = vsel %vm679, %v1281, 0
        %1391 = vmatpush.xpose.msra.mxu0 0.0
        %1392 = vmatpush.xpose.msra.mxu0 0.0
        %1393 = vmatpush.xpose.msra.mxu0 0.0
        %1394 = vmatpush.xpose.msra.mxu0 0.0
        %1395 = vmatpush.xpose.msra.mxu0 0.0
        %1396 = vmatpush.xpose.msra.mxu0 0.0
        %1397 = vmatpush.xpose.msra.mxu0 0.0
        %1398 = vmatpush.xpose.msra.mxu0 0.0
        %1399 = vmatpush.xpose.msra.mxu0 0.0
        %1400 = vmatpush.xpose.msra.mxu0 0.0
        %1401 = vmatpush.xpose.msra.mxu0 0.0
        %1402 = vmatpush.xpose.msra.mxu0 0.0
        %1403 = vmatpush.xpose.msra.mxu0 0.0
        %1404 = vmatpush.xpose.msra.mxu0 0.0
        %1405 = vmatpush.xpose.msra.mxu0 %v1389
        %1406 = vmatpush.xpose.msra.mxu0 %v1386
        %1407 = vmatmul.f32.gmra.mxu0 %v1362
        %v1408 = vpop.f32.mrf.mxu0
        %v1409 = vadd.f32 %v1206, %v1408
        %1410 = vmatmul.f32.gmra.mxu0 %v1365
        %v1411 = vpop.f32.mrf.mxu0
        %v1412 = vadd.f32 %v1207, %v1411
        %1413 = vmatmul.f32.gmra.mxu0 %v1368
        %v1414 = vpop.f32.mrf.mxu0
        %v1415 = vadd.f32 %v1208, %v1414
        %1416 = vmatmul.f32.gmra.mxu0 %v1371
        %v1417 = vpop.f32.mrf.mxu0
        %v1418 = vadd.f32 %v1209, %v1417
        %1419 = vmatmul.f32.gmra.mxu0 %v1374
        %v1420 = vpop.f32.mrf.mxu0
        %v1421 = vadd.f32 %v1210, %v1420
        %1422 = vmatmul.f32.gmra.mxu0 %v1377
        %v1423 = vpop.f32.mrf.mxu0
        %v1424 = vadd.f32 %v1211, %v1423
        %1425 = vmatmul.f32.gmra.mxu0 %v1380
        %v1426 = vpop.f32.mrf.mxu0
        %v1427 = vadd.f32 %v1212, %v1426
        %1428 = vmatmul.f32.gmra.mxu0 %v1383
        %v1429 = vpop.f32.mrf.mxu0
        %v1430 = vadd.f32 %v1213, %v1429
        %1431 = vdwg.mxu0
        %v1432 = vsel %vm755, %v1409, -inf
        %1433 = vmax.xlane.f32.xlu0 %v1432
        %v1434 = vpop.xlane.xlu0 %1433
        %v1435 = vsel %vm755, %v1412, -inf
        %1436 = vmax.xlane.f32.xlu0 %v1435
        %v1437 = vpop.xlane.xlu0 %1436
        %v1438 = vsel %vm755, %v1415, -inf
        %1439 = vmax.xlane.f32.xlu0 %v1438
        %v1440 = vpop.xlane.xlu0 %1439
        %v1441 = vsel %vm755, %v1418, -inf
        %1442 = vmax.xlane.f32.xlu0 %v1441
        %v1443 = vpop.xlane.xlu0 %1442
        %v1444 = vsel %vm755, %v1421, -inf
        %1445 = vmax.xlane.f32.xlu0 %v1444
        %v1446 = vpop.xlane.xlu0 %1445
        %v1447 = vsel %vm755, %v1424, -inf
        %1448 = vmax.xlane.f32.xlu0 %v1447
        %v1449 = vpop.xlane.xlu0 %1448
        %v1450 = vsel %vm755, %v1427, -inf
        %1451 = vmax.xlane.f32.xlu0 %v1450
        %v1452 = vpop.xlane.xlu0 %1451
        %v1453 = vsel %vm755, %v1430, -inf
        %1454 = vmax.xlane.f32.xlu0 %v1453
        %v1455 = vpop.xlane.xlu0 %1454
        %v1456 = vsub.f32 %v1409, %v1434
        %v1457 = vsub.f32 %v1412, %v1437
        %v1458 = vsub.f32 %v1415, %v1440
        %v1459 = vsub.f32 %v1418, %v1443
        %v1460 = vsub.f32 %v1421, %v1446
        %v1461 = vsub.f32 %v1424, %v1449
        %v1462 = vsub.f32 %v1427, %v1452
        %v1463 = vsub.f32 %v1430, %v1455
        %v1464 = vmul.f32 %v1456, 1.442695
        %v1465 = vpow.pop %v1464
        %v1466 = vmul.f32 %v1457, 1.442695
        %v1467 = vpow.pop %v1466
        %v1468 = vmul.f32 %v1458, 1.442695
        %v1469 = vpow.pop %v1468
        %v1470 = vmul.f32 %v1459, 1.442695
        %v1471 = vpow.pop %v1470
        %v1472 = vmul.f32 %v1460, 1.442695
        %v1473 = vpow.pop %v1472
        %v1474 = vmul.f32 %v1461, 1.442695
        %v1475 = vpow.pop %v1474
        %v1476 = vmul.f32 %v1462, 1.442695
        %v1477 = vpow.pop %v1476
        %v1478 = vmul.f32 %v1463, 1.442695
        %v1479 = vpow.pop %v1478
        %v1480 = vsel %vm755, %v1465, 0.0
        %1481 = vadd.xlane.f32.xlu0 %v1480
        %v1482 = vpop.xlane.xlu0 %1481
        %v1483 = vsel %vm755, %v1467, 0.0
        %1484 = vadd.xlane.f32.xlu0 %v1483
        %v1485 = vpop.xlane.xlu0 %1484
        %v1486 = vsel %vm755, %v1469, 0.0
        %1487 = vadd.xlane.f32.xlu0 %v1486
        %v1488 = vpop.xlane.xlu0 %1487
        %v1489 = vsel %vm755, %v1471, 0.0
        %1490 = vadd.xlane.f32.xlu0 %v1489
        %v1491 = vpop.xlane.xlu0 %1490
        %v1492 = vsel %vm755, %v1473, 0.0
        %1493 = vadd.xlane.f32.xlu0 %v1492
        %v1494 = vpop.xlane.xlu0 %1493
        %v1495 = vsel %vm755, %v1475, 0.0
        %1496 = vadd.xlane.f32.xlu0 %v1495
        %v1497 = vpop.xlane.xlu0 %1496
        %v1498 = vsel %vm755, %v1477, 0.0
        %1499 = vadd.xlane.f32.xlu0 %v1498
        %v1500 = vpop.xlane.xlu0 %1499
        %v1501 = vsel %vm755, %v1479, 0.0
        %1502 = vadd.xlane.f32.xlu0 %v1501
        %v1503 = vpop.xlane.xlu0 %1502
        %v1504 = vrcp.pop %v1482
        %v1505 = vrcp.pop %v1485
        %v1506 = vrcp.pop %v1488
        %v1507 = vrcp.pop %v1491
        %v1508 = vrcp.pop %v1494
        %v1509 = vrcp.pop %v1497
        %v1510 = vrcp.pop %v1500
        %v1511 = vrcp.pop %v1503
        %v1512 = vmul.f32 %v1482, %v1504
        %v1513 = vmul.f32 %v1485, %v1505
        %v1514 = vmul.f32 %v1488, %v1506
        %v1515 = vmul.f32 %v1491, %v1507
        %v1516 = vmul.f32 %v1494, %v1508
        %v1517 = vmul.f32 %v1497, %v1509
        %v1518 = vmul.f32 %v1500, %v1510
        %v1519 = vmul.f32 %v1503, %v1511
        %v1520 = vsub.f32 2.0, %v1512
        %v1521 = vsub.f32 2.0, %v1513
        %v1522 = vsub.f32 2.0, %v1514
        %v1523 = vsub.f32 2.0, %v1515
        %v1524 = vsub.f32 2.0, %v1516
        %v1525 = vsub.f32 2.0, %v1517
        %v1526 = vsub.f32 2.0, %v1518
        %v1527 = vsub.f32 2.0, %v1519
        %v1528 = vmul.f32 %v1504, %v1520
        %v1529 = vmul.f32 %v1505, %v1521
        %v1530 = vmul.f32 %v1506, %v1522
        %v1531 = vmul.f32 %v1507, %v1523
        %v1532 = vmul.f32 %v1508, %v1524
        %v1533 = vmul.f32 %v1509, %v1525
        %v1534 = vmul.f32 %v1510, %v1526
        %v1535 = vmul.f32 %v1511, %v1527
        %v1536 = vmul.f32 %v1465, %v1528
        %v1537 = vmul.f32 %v1467, %v1529
        %v1538 = vmul.f32 %v1469, %v1530
        %v1539 = vmul.f32 %v1471, %v1531
        %v1540 = vmul.f32 %v1473, %v1532
        %v1541 = vmul.f32 %v1475, %v1533
        %v1542 = vmul.f32 %v1477, %v1534
        %v1543 = vmul.f32 %v1479, %v1535
        %v1545 = vsel %vm755, %v1536, 0
        %v1548 = vsel %vm755, %v1537, 0
        %v1551 = vsel %vm755, %v1538, 0
        %v1554 = vsel %vm755, %v1539, 0
        %v1557 = vsel %vm755, %v1540, 0
        %v1560 = vsel %vm755, %v1541, 0
        %v1563 = vsel %vm755, %v1542, 0
        %v1566 = vsel %vm755, %v1543, 0
        %1568 = vmatpush.msra.mxu0 0.0
        %1569 = vmatpush.msra.mxu0 0.0
        %1570 = vmatpush.msra.mxu0 0.0
        %1571 = vmatpush.msra.mxu0 0.0
        %1572 = vmatpush.msra.mxu0 0.0
        %1573 = vmatpush.msra.mxu0 0.0
        %1574 = vmatpush.msra.mxu0 0.0
        %1575 = vmatpush.msra.mxu0 0.0
        %1576 = vmatpush.msra.mxu0 0.0
        %1577 = vmatpush.msra.mxu0 0.0
        %1578 = vmatpush.msra.mxu0 0.0
        %1579 = vmatpush.msra.mxu0 0.0
        %1580 = vmatpush.msra.mxu0 0.0
        %1581 = vmatpush.msra.mxu0 0.0
        %1582 = vmatpush.msra.mxu0 %v1258
        %1583 = vmatpush.msra.mxu0 %v1255
        %1584 = vmatmul.f32.gmra.mxu0 %v1545
        %v1585 = vpop.f32.mrf.mxu0
        %v1586 = vadd.f32 0.0, %v1585
        %1587 = vmatmul.f32.gmra.mxu0 %v1548
        %v1588 = vpop.f32.mrf.mxu0
        %v1589 = vadd.f32 0.0, %v1588
        %1590 = vmatmul.f32.gmra.mxu0 %v1551
        %v1591 = vpop.f32.mrf.mxu0
        %v1592 = vadd.f32 0.0, %v1591
        %1593 = vmatmul.f32.gmra.mxu0 %v1554
        %v1594 = vpop.f32.mrf.mxu0
        %v1595 = vadd.f32 0.0, %v1594
        %1596 = vmatmul.f32.gmra.mxu0 %v1557
        %v1597 = vpop.f32.mrf.mxu0
        %v1598 = vadd.f32 0.0, %v1597
        %1599 = vmatmul.f32.gmra.mxu0 %v1560
        %v1600 = vpop.f32.mrf.mxu0
        %v1601 = vadd.f32 0.0, %v1600
        %1602 = vmatmul.f32.gmra.mxu0 %v1563
        %v1603 = vpop.f32.mrf.mxu0
        %v1604 = vadd.f32 0.0, %v1603
        %1605 = vmatmul.f32.gmra.mxu0 %v1566
        %v1606 = vpop.f32.mrf.mxu0
        %v1607 = vadd.f32 0.0, %v1606
        %1608 = vdwg.mxu0
        %v1609 = vmul.f32 %v1586, %v646
        %v1610 = vmul.f32 %v1589, %v647
        %v1611 = vmul.f32 %v1592, %v648
        %v1612 = vmul.f32 %v1595, %v649
        %v1613 = vmul.f32 %v1598, %v650
        %v1614 = vmul.f32 %v1601, %v651
        %v1615 = vmul.f32 %v1604, %v652
        %v1616 = vmul.f32 %v1607, %v653
        %1617 = vmatpush.msra.mxu0 0.0
        %1618 = vmatpush.msra.mxu0 0.0
        %1619 = vmatpush.msra.mxu0 0.0
        %1620 = vmatpush.msra.mxu0 0.0
        %1621 = vmatpush.msra.mxu0 0.0
        %1622 = vmatpush.msra.mxu0 0.0
        %1623 = vmatpush.msra.mxu0 0.0
        %1624 = vmatpush.msra.mxu0 0.0
        %1625 = vmatpush.msra.mxu0 %v1616
        %1626 = vmatpush.msra.mxu0 %v1615
        %1627 = vmatpush.msra.mxu0 %v1614
        %1628 = vmatpush.msra.mxu0 %v1613
        %1629 = vmatpush.msra.mxu0 %v1612
        %1630 = vmatpush.msra.mxu0 %v1611
        %1631 = vmatpush.msra.mxu0 %v1610
        %1632 = vmatpush.msra.mxu0 %v1609
        %1633 = vmatmul.f32.gmra.mxu0 %v1087
        %v1634 = vpop.f32.mrf.mxu0
        %v1635 = vadd.f32 0.0, %v1634
        %1636 = vmatmul.f32.gmra.mxu0 %v1090
        %v1637 = vpop.f32.mrf.mxu0
        %v1638 = vadd.f32 0.0, %v1637
        %1639 = vdwg.mxu0
        %v1640 = vperm.slane %v1230, 0
        %v1642 = vsel %vm679, %v1635, 0
        %v1645 = vsel %vm679, %v1638, 0
        %1647 = vmatpush.msra.mxu0 0.0
        %1648 = vmatpush.msra.mxu0 0.0
        %1649 = vmatpush.msra.mxu0 0.0
        %1650 = vmatpush.msra.mxu0 0.0
        %1651 = vmatpush.msra.mxu0 0.0
        %1652 = vmatpush.msra.mxu0 0.0
        %1653 = vmatpush.msra.mxu0 0.0
        %1654 = vmatpush.msra.mxu0 0.0
        %1655 = vmatpush.msra.mxu0 0.0
        %1656 = vmatpush.msra.mxu0 0.0
        %1657 = vmatpush.msra.mxu0 0.0
        %1658 = vmatpush.msra.mxu0 0.0
        %1659 = vmatpush.msra.mxu0 %v1229
        %1660 = vmatpush.msra.mxu0 %v1228
        %1661 = vmatpush.msra.mxu0 %v1227
        %1662 = vmatpush.msra.mxu0 %v1226
        %1663 = vmatmul.f32.gmra.mxu0 %v1642
        %v1664 = vpop.f32.mrf.mxu0
        %v1665 = vadd.f32 %v1640, %v1664
        %1666 = vmatmul.f32.gmra.mxu0 %v1645
        %v1667 = vpop.f32.mrf.mxu0
        %v1668 = vadd.f32 %v1640, %v1667
        %1669 = vdwg.mxu0
        %v1670 = vadd.f32 %v1665, %v1204
        %v1671 = vadd.f32 %v1668, %v1205
        %v1672 = vld [vmem:[%s568 + $0x4] sm:$0x1]
        %v1673 = vld [vmem:[%s568 + $0x5] sm:$0x1]
        %v1674 = vsel %vm679, %v1670, 0.0
        %1675 = vadd.xlane.f32.xlu0 %v1674
        %v1676 = vpop.xlane.xlu0 %1675
        %v1677 = vsel %vm679, %v1671, 0.0
        %1678 = vadd.xlane.f32.xlu0 %v1677
        %v1679 = vpop.xlane.xlu0 %1678
        %v1680 = vmul.f32 %v1676, %v1161
        %v1681 = vmul.f32 %v1679, %v1161
        %v1682 = vsub.f32 %v1670, %v1680
        %v1683 = vsub.f32 %v1671, %v1681
        %v1684 = vmul.f32 %v1682, %v1682
        %v1685 = vmul.f32 %v1683, %v1683
        %v1686 = vsel %vm679, %v1684, 0.0
        %1687 = vadd.xlane.f32.xlu0 %v1686
        %v1688 = vpop.xlane.xlu0 %1687
        %v1689 = vsel %vm679, %v1685, 0.0
        %1690 = vadd.xlane.f32.xlu0 %v1689
        %v1691 = vpop.xlane.xlu0 %1690
        %v1692 = vmul.f32 %v1688, %v1161
        %v1693 = vmul.f32 %v1691, %v1161
        %v1694 = vadd.f32 %v1692, 1e-05
        %v1695 = vadd.f32 %v1693, 1e-05
        %v1696 = vrsqrt.pop %v1694
        %v1697 = vmul.f32 %v1696, %v1694
        %v1698 = vmul.f32 %v1697, %v1696
        %v1699 = vmul.f32 0.5, %v1698
        %v1700 = vsub.f32 1.5, %v1699
        %v1701 = vmul.f32 %v1696, %v1700
        %vm1702 = vweird.f32 %v1694
        %vm1703 = vweird.f32 %v1696
        %vm1704 = vmor %vm1702, %vm1703
        %v1705 = vsel %vm1704, %v1696, %v1701
        %v1706 = vrsqrt.pop %v1695
        %v1707 = vmul.f32 %v1706, %v1695
        %v1708 = vmul.f32 %v1707, %v1706
        %v1709 = vmul.f32 0.5, %v1708
        %v1710 = vsub.f32 1.5, %v1709
        %v1711 = vmul.f32 %v1706, %v1710
        %vm1712 = vweird.f32 %v1695
        %vm1713 = vweird.f32 %v1706
        %vm1714 = vmor %vm1712, %vm1713
        %v1715 = vsel %vm1714, %v1706, %v1711
        %v1716 = vmul.f32 %v1682, %v1705
        %v1717 = vmul.f32 %v1683, %v1715
        %v1718 = vperm.slane %v1672, 0
        %v1719 = vmul.f32 %v1716, %v1718
        %v1720 = vmul.f32 %v1717, %v1718
        %v1721 = vperm.slane %v1673, 0
        %v1722 = vadd.f32 %v1719, %v1721
        %v1723 = vadd.f32 %v1720, %v1721
        %v1724 = vld [vmem:[%s573] sm:$0xff]
        %v1725 = vld [vmem:[%s573 + $0x8] sm:$0xff]
        %v1726 = vld [vmem:[%s573 + $0x10] sm:$0xff]
        %v1727 = vld [vmem:[%s573 + $0x18] sm:$0xff]
        %v1728 = vld [vmem:[%s576] sm:$0x1]
        %v1730 = vperm.slane %v1728, 0
        %v1733 = vsel %vm679, %v1722, 0
        %v1736 = vsel %vm679, %v1723, 0
        %1738 = vmatpush.msra.mxu0 0.0
        %1739 = vmatpush.msra.mxu0 0.0
        %1740 = vmatpush.msra.mxu0 0.0
        %1741 = vmatpush.msra.mxu0 0.0
        %1742 = vmatpush.msra.mxu0 0.0
        %1743 = vmatpush.msra.mxu0 0.0
        %1744 = vmatpush.msra.mxu0 0.0
        %1745 = vmatpush.msra.mxu0 0.0
        %1746 = vmatpush.msra.mxu0 0.0
        %1747 = vmatpush.msra.mxu0 0.0
        %1748 = vmatpush.msra.mxu0 0.0
        %1749 = vmatpush.msra.mxu0 0.0
        %1750 = vmatpush.msra.mxu0 %v1727
        %1751 = vmatpush.msra.mxu0 %v1726
        %1752 = vmatpush.msra.mxu0 %v1725
        %1753 = vmatpush.msra.mxu0 %v1724
        %1754 = vmatmul.f32.gmra.mxu0 %v1733
        %v1755 = vpop.f32.mrf.mxu0
        %v1756 = vadd.f32 %v1730, %v1755
        %1757 = vmatmul.f32.gmra.mxu0 %v1736
        %v1758 = vpop.f32.mrf.mxu0
        %v1759 = vadd.f32 %v1730, %v1758
        %1760 = vdwg.mxu0
        %v1761 = vmax.f32 %v1756, 0.0
        %v1762 = vmax.f32 %v1759, 0.0
        %v1763 = vld [vmem:[%s581] sm:$0xff]
        %v1764 = vld [vmem:[%s581 + $0x8] sm:$0xff]
        %v1765 = vld [vmem:[%s581 + $0x10] sm:$0xff]
        %v1766 = vld [vmem:[%s581 + $0x18] sm:$0xff]
        %v1767 = vld [vmem:[%s581 + $0x20] sm:$0xff]
        %v1768 = vld [vmem:[%s581 + $0x28] sm:$0xff]
        %v1769 = vld [vmem:[%s581 + $0x30] sm:$0xff]
        %v1770 = vld [vmem:[%s581 + $0x38] sm:$0xff]
        %v1771 = vld [vmem:[%s581 + $0x40] sm:$0xff]
        %v1772 = vld [vmem:[%s581 + $0x48] sm:$0xff]
        %v1773 = vld [vmem:[%s581 + $0x50] sm:$0xff]
        %v1774 = vld [vmem:[%s581 + $0x58] sm:$0xff]
        %v1775 = vld [vmem:[%s581 + $0x60] sm:$0xff]
        %v1776 = vld [vmem:[%s581 + $0x68] sm:$0xff]
        %v1777 = vld [vmem:[%s581 + $0x70] sm:$0xff]
        %v1778 = vld [vmem:[%s581 + $0x78] sm:$0xff]
        %v1779 = vld [vmem:[%s568 + $0x6] sm:$0x1]
        %v1780 = vperm.slane %v1779, 0
        %1781 = vmatpush.msra.mxu0 %v1778
        %1782 = vmatpush.msra.mxu0 %v1777
        %1783 = vmatpush.msra.mxu0 %v1776
        %1784 = vmatpush.msra.mxu0 %v1775
        %1785 = vmatpush.msra.mxu0 %v1774
        %1786 = vmatpush.msra.mxu0 %v1773
        %1787 = vmatpush.msra.mxu0 %v1772
        %1788 = vmatpush.msra.mxu0 %v1771
        %1789 = vmatpush.msra.mxu0 %v1770
        %1790 = vmatpush.msra.mxu0 %v1769
        %1791 = vmatpush.msra.mxu0 %v1768
        %1792 = vmatpush.msra.mxu0 %v1767
        %1793 = vmatpush.msra.mxu0 %v1766
        %1794 = vmatpush.msra.mxu0 %v1765
        %1795 = vmatpush.msra.mxu0 %v1764
        %1796 = vmatpush.msra.mxu0 %v1763
        %1797 = vmatmul.f32.gmra.mxu0 %v1761
        %v1798 = vpop.f32.mrf.mxu0
        %v1799 = vadd.f32 %v1780, %v1798
        %1800 = vmatmul.f32.gmra.mxu0 %v1762
        %v1801 = vpop.f32.mrf.mxu0
        %v1802 = vadd.f32 %v1780, %v1801
        %1803 = vdwg.mxu0
        %v1804 = vadd.f32 %v1799, %v1722
        %v1805 = vadd.f32 %v1802, %v1723
        %v1806 = vld [vmem:[%s568 + $0x7] sm:$0x1]
        %v1807 = vld [vmem:[%s568 + $0x8] sm:$0x1]
        %v1808 = vsel %vm679, %v1804, 0.0
        %1809 = vadd.xlane.f32.xlu0 %v1808
        %v1810 = vpop.xlane.xlu0 %1809
        %v1811 = vsel %vm679, %v1805, 0.0
        %1812 = vadd.xlane.f32.xlu0 %v1811
        %v1813 = vpop.xlane.xlu0 %1812
        %v1814 = vmul.f32 %v1810, %v1161
        %v1815 = vmul.f32 %v1813, %v1161
        %v1816 = vsub.f32 %v1804, %v1814
        %v1817 = vsub.f32 %v1805, %v1815
        %v1818 = vmul.f32 %v1816, %v1816
        %v1819 = vmul.f32 %v1817, %v1817
        %v1820 = vsel %vm679, %v1818, 0.0
        %1821 = vadd.xlane.f32.xlu0 %v1820
        %v1822 = vpop.xlane.xlu0 %1821
        %v1823 = vsel %vm679, %v1819, 0.0
        %1824 = vadd.xlane.f32.xlu0 %v1823
        %v1825 = vpop.xlane.xlu0 %1824
        %v1826 = vmul.f32 %v1822, %v1161
        %v1827 = vmul.f32 %v1825, %v1161
        %v1828 = vadd.f32 %v1826, 1e-05
        %v1829 = vadd.f32 %v1827, 1e-05
        %v1830 = vrsqrt.pop %v1828
        %v1831 = vmul.f32 %v1830, %v1828
        %v1832 = vmul.f32 %v1831, %v1830
        %v1833 = vmul.f32 0.5, %v1832
        %v1834 = vsub.f32 1.5, %v1833
        %v1835 = vmul.f32 %v1830, %v1834
        %vm1836 = vweird.f32 %v1828
        %vm1837 = vweird.f32 %v1830
        %vm1838 = vmor %vm1836, %vm1837
        %v1839 = vsel %vm1838, %v1830, %v1835
        %v1840 = vrsqrt.pop %v1829
        %v1841 = vmul.f32 %v1840, %v1829
        %v1842 = vmul.f32 %v1841, %v1840
        %v1843 = vmul.f32 0.5, %v1842
        %v1844 = vsub.f32 1.5, %v1843
        %v1845 = vmul.f32 %v1840, %v1844
        %vm1846 = vweird.f32 %v1829
        %vm1847 = vweird.f32 %v1840
        %vm1848 = vmor %vm1846, %vm1847
        %v1849 = vsel %vm1848, %v1840, %v1845
        %v1850 = vmul.f32 %v1816, %v1839
        %v1851 = vmul.f32 %v1817, %v1849
        %v1852 = vperm.slane %v1806, 0
        %v1853 = vmul.f32 %v1850, %v1852
        %v1854 = vmul.f32 %v1851, %v1852
        %v1855 = vperm.slane %v1807, 0
        %v1856 = vadd.f32 %v1853, %v1855
        %v1857 = vadd.f32 %v1854, %v1855
        %1858 = vst.msk [vmem:[#allocation2] sm:$0xff] %vm679, %v1856
        %1859 = vst.msk [vmem:[#allocation2 + $0x8] sm:$0xff] %vm679, %v1857
        %p1860 = scmp.eq.s32.totalorder %s28, 1
        // Predicated region
        $region89: #{decoder_forward.1} parent=83 // pred_check
          %p1861 = pneg %p1860
        $region90: #{decoder_forward.1} parent=83 // pred_check_branch
          %1863 = sbr.rel (%p1861) target = $region92
        $region91: #{decoder_forward.1} parent=83 // pred_region
          %v1864 = vld [vmem:[%s14] sm:$0xff]
          %v1865 = vld [vmem:[%s14 + $0x8] sm:$0xff]
          %v1866 = vld [vmem:[%s14 + $0x10] sm:$0xff]
          %v1867 = vld [vmem:[%s14 + $0x18] sm:$0xff]
          %v1868 = vld [vmem:[%s15] sm:$0x1]
          %v1870 = vperm.slane %v1868, 0
          %v1873 = vsel %vm679, %v1856, 0
          %v1876 = vsel %vm679, %v1857, 0
          %1878 = vmatpush.msra.mxu0 0.0
          %1879 = vmatpush.msra.mxu0 0.0
          %1880 = vmatpush.msra.mxu0 0.0
          %1881 = vmatpush.msra.mxu0 0.0
          %1882 = vmatpush.msra.mxu0 0.0
          %1883 = vmatpush.msra.mxu0 0.0
          %1884 = vmatpush.msra.mxu0 0.0
          %1885 = vmatpush.msra.mxu0 0.0
          %1886 = vmatpush.msra.mxu0 0.0
          %1887 = vmatpush.msra.mxu0 0.0
          %1888 = vmatpush.msra.mxu0 0.0
          %1889 = vmatpush.msra.mxu0 0.0
          %1890 = vmatpush.msra.mxu0 %v1867
          %1891 = vmatpush.msra.mxu0 %v1866
          %1892 = vmatpush.msra.mxu0 %v1865
          %1893 = vmatpush.msra.mxu0 %v1864
          %1894 = vmatmul.f32.gmra.mxu0 %v1873
          %v1895 = vpop.f32.mrf.mxu0
          %v1896 = vadd.f32 %v1870, %v1895
          %1897 = vmatmul.f32.gmra.mxu0 %v1876
          %v1898 = vpop.f32.mrf.mxu0
          %v1899 = vadd.f32 %v1870, %v1898
          %1900 = vdwg.mxu0
          %1901 = vst [vmem:[#allocation3] sm:$0xff] %v1896
          %1902 = vst [vmem:[#allocation3 + $0x8] sm:$0xff] %v1899
        $region92: #{decoder_forward.1} parent=83 // pred_fallthru
          _
        // Predicated region
        $region93: #{decoder_forward.1} parent=83 // pred_check
          %p1903 = pneg %p402
        $region94: #{decoder_forward.1} parent=83 // pred_check_branch
          %1905 = sbr.rel (%p1903) target = $region96
        $region95: #{decoder_forward.1} parent=83 // pred_region
          %1907 = vsyncadd [#allocation4], 0
          %s1908 = sshll.u32 [#allocation3], 4
          %s1909 = int_to_ptr.vmem [resolvable:$true] %s1908
          %s1910 = sshll.u32 %s16, 4
          %s1911 = int_to_ptr.hbm [resolvable:$true] %s1910
          %1916 = dma.vmem_to_hbm [thread:$0]  %s1909, 256, %s1911, [#allocation4], 128, 128, 8
        $region96: #{decoder_forward.1} parent=83 // pred_fallthru
          _
        // Predicated region
        $region97: #{decoder_forward.1} parent=83 // pred_check
          %p1917 = pneg %p402
        $region98: #{decoder_forward.1} parent=83 // pred_check_branch
          %1919 = sbr.rel (%p1917) target = $region100
        $region99: #{decoder_forward.1} parent=83 // pred_region
          %1921 = dma.done [#allocation4], 256
        $region100: #{decoder_forward.1} parent=83 // pred_fallthru
          _
      $region84: #{decoder_forward.1} parent=5 // pred_fallthru
        _
      %p1922 = scmp.le.s32.totalorder 2, %s23
      // Predicated region
      $region101: #{decoder_forward.1} parent=5 // pred_check
        %p1923 = pneg %p1922
      $region102: #{decoder_forward.1} parent=5 // pred_check_branch
        %1925 = sbr.rel (%p1923) target = $region104
      $region103: #{decoder_forward.1} parent=5 // pred_region
        %s1926 = ssub.s32 %s23, 2
      $region104: #{decoder_forward.1} parent=5 // pred_fallthru
        _
    $region6: #{decoder_forward.1} parent=1 // loop_footer
      %s27 = sadd.s32 1, %s23
    $region7: #{decoder_forward.1} parent=1 // loop_footer_branch
      %22 = sbr.rel target = $region3
    $region8: #{decoder_forward.1} parent=1 // loop_exit
      _
    %1927 = vsyncpa [#allocation4], 1
    %s1928 = scalar_lea.sflag [#allocation4], 1
    %1929 = vsyncpa %s1928, 1

</llo_original>
